<compile_context>
chip_gen: v5e
topology: v5e:2x2
jax: 0.10.0
libtpu: 0.0.40
codegen_flags: <defaults>
</compile_context>

<pallas_src>
import functools
import math

import jax
import jax.numpy as jnp
from jax.experimental import pallas as pl
from jax.experimental.pallas import tpu as pltpu


# ----------------------------------------------------------------------------------
# Kernel body (shared by the cross-attention and self-attention entry kernels)
# ----------------------------------------------------------------------------------
def _attention_ln_body(x_q, x_k, x_v, mask2d, wq_ref, wk_ref, wv_ref, wo_ref,
                       gamma_ref, beta_ref, o_ref, ctx_ref, *,
                       head_num, d_head, ln_eps):
    tq = x_q.shape[0]          # query rows in this grid step
    s_kv = x_k.shape[0]        # full key/value length
    cdt = wq_ref.dtype         # MXU input dtype (bf16 by default; f32 optional)

    # Additive mask bias in f32, broadcast ONCE (hoisted out of the per-head loop).
    bias = jnp.broadcast_to(mask2d.astype(jnp.float32) * (-1.0e9), (tq, s_kv))

    # Dense full-width projections (x @ W, weights pre-transposed in the wrapper;
    # the 1/sqrt(d_head) softmax scale is pre-folded into W_q).
    qp = jnp.dot(x_q.astype(cdt), wq_ref[...], preferred_element_type=jnp.float32)
    kp = jnp.dot(x_k.astype(cdt), wk_ref[...], preferred_element_type=jnp.float32)
    vp = jnp.dot(x_v.astype(cdt), wv_ref[...], preferred_element_type=jnp.float32)

    # Cast once so QK^T and att@V also feed the MXU in compute dtype (f32 accumulation).
    qc = qp.astype(cdt)
    kc = kp.astype(cdt)
    vc = vp.astype(cdt)

    # Contract last dim of q with last dim of k: q @ k^T without an explicit transpose.
    qkt_dims = (((1,), (1,)), ((), ()))

    # Per-head attention via static lane slices; each head's context goes straight into
    # the (tq, D) VMEM scratch (no concat of H live arrays).
    # TODO(synk): for head_num >= 8 switch to lax.fori_loop (live-range bound) and pad
    # d_head to a 128-lane multiple so slices/stores are lane-aligned at production widths.
    for h in range(head_num):
        sl = slice(h * d_head, (h + 1) * d_head)
        att = jax.lax.dot_general(qc[:, sl], kc[:, sl], dimension_numbers=qkt_dims,
                                  preferred_element_type=jnp.float32)   # (tq, s_kv) f32
        att = att + bias
        att = att - jnp.max(att, axis=-1, keepdims=True)
        att = jnp.exp(att)
        # EUP approximate reciprocal (~2^-12 rel): fine for inference-quality numerics.
        att = att * pl.reciprocal(jnp.sum(att, axis=-1, keepdims=True), approx=True)
        ctx_ref[:, sl] = jnp.dot(att.astype(cdt), vc[:, sl],
                                 preferred_element_type=jnp.float32)

    # Output projection on the merged heads.
    out = jnp.dot(ctx_ref[...].astype(cdt), wo_ref[...],
                  preferred_element_type=jnp.float32)

    # TODO(synk): dropout is an inference-time identity (nn.Dropout in eval mode).
    out = out + x_q                               # residual (= q.clone()), kept in f32

    # LayerNorm over the feature dim with f32 statistics.
    mu = jnp.mean(out, axis=-1, keepdims=True)
    var = jnp.mean(jnp.square(out - mu), axis=-1, keepdims=True)
    xhat = (out - mu) * jax.lax.rsqrt(var + ln_eps)
    o_ref[0] = (xhat * gamma_ref[...] + beta_ref[...]).astype(o_ref.dtype)


def _mha_cross_kernel(q_ref, k_ref, v_ref, mask_ref, wq_ref, wk_ref, wv_ref, wo_ref,
                      gamma_ref, beta_ref, o_ref, ctx_ref, *,
                      head_num, d_head, ln_eps):
    _attention_ln_body(q_ref[0], k_ref[0], v_ref[0], mask_ref[0, 0],
                       wq_ref, wk_ref, wv_ref, wo_ref, gamma_ref, beta_ref,
                       o_ref, ctx_ref, head_num=head_num, d_head=d_head, ln_eps=ln_eps)


def _mha_self_kernel(x_ref, mask_ref, wq_ref, wk_ref, wv_ref, wo_ref,
                     gamma_ref, beta_ref, o_ref, ctx_ref, *,
                     q_tile, head_num, d_head, ln_eps):
    # Self-attention: the shared activation is DMA'd once per batch (constant block
    # index over the query-tile axis); the query rows are a cheap VMEM slice.
    q0 = pl.multiple_of(pl.program_id(1) * q_tile, q_tile)
    x_q = x_ref[0, pl.ds(q0, q_tile), :]
    x_full = x_ref[0]
    _attention_ln_body(x_q, x_full, x_full, mask_ref[0, 0],
                       wq_ref, wk_ref, wv_ref, wo_ref, gamma_ref, beta_ref,
                       o_ref, ctx_ref, head_num=head_num, d_head=d_head, ln_eps=ln_eps)


# ----------------------------------------------------------------------------------
# Wrapper
# ----------------------------------------------------------------------------------
def _pick_q_tile(seq_len):
    if seq_len <= 256:
        return seq_len
    for tq in (256, 128, 64, 32, 16, 8):
        if seq_len % tq == 0:
            return tq
    return seq_len


def _pick_vmem_limit():
    """~3/4 of this generation's VMEM (96 MiB on v5e/v6e, 48 MiB on v7x)."""
    cap = 128 * 1024 * 1024
    try:
        cap = int(getattr(pltpu.get_tpu_info(), "vmem_capacity_bytes", cap))
    except Exception:
        pass
    return max(32 * 1024 * 1024, min((cap * 3) // 4, 96 * 1024 * 1024))


def multi_head_attention(q, k, v, pad_mask, params, *, head_num, ln_eps=1e-5,
                         compute_dtype=jnp.bfloat16, q_tile=None):
    """q, k, v: (B, S, D) float32; pad_mask: (B, 1, 1, S) or (B, 1, S, S), nonzero = pad.

    params = (wq, wk, wv, wo, gamma, beta) with wX stored PyTorch-style (out, in).
    compute_dtype feeds the MXU (bf16 by default on all TPU generations); accumulation,
    mask add, softmax and LayerNorm stay in float32.
    """
    B, S, D = q.shape
    assert D % head_num == 0
    d_head = D // head_num
    wq, wk, wv, wo, gamma, beta = params

    M = pad_mask.shape[2]
    assert pad_mask.shape == (B, 1, M, S) and M in (1, S)

    self_attention = (q is k) and (k is v)

    if q_tile is None:
        q_tile = _pick_q_tile(S)
    assert S % q_tile == 0
    nq = S // q_tile

    # One-time wrapper-side layout / dtype prep (plain XLA ops, NOT per-grid-step work):
    # nn.Linear stores W as (out, in); pre-transpose to (in, out) and fold the softmax
    # scale into W_q so the kernel never scales scores or transposes anything.
    scale = 1.0 / math.sqrt(d_head)
    wq_t = jnp.asarray(wq.T * scale, dtype=compute_dtype)
    wk_t = jnp.asarray(wk.T, dtype=compute_dtype)
    wv_t = jnp.asarray(wv.T, dtype=compute_dtype)
    wo_t = jnp.asarray(wo.T, dtype=compute_dtype)
    gamma2 = jnp.asarray(gamma, dtype=jnp.float32).reshape(1, D)
    beta2 = jnp.asarray(beta, dtype=jnp.float32).reshape(1, D)
    # Binary pad mask shipped as int8 (4x less HBM traffic than f32).
    mask_i8 = (jnp.asarray(pad_mask) != 0).astype(jnp.int8)

    common = dict(head_num=head_num, d_head=d_head, ln_eps=ln_eps)
    if self_attention:
        kernel = functools.partial(_mha_self_kernel, q_tile=q_tile, **common)
        inputs = (q, mask_i8, wq_t, wk_t, wv_t, wo_t, gamma2, beta2)
    else:
        kernel = functools.partial(_mha_cross_kernel, **common)
        inputs = (q, k, v, mask_i8, wq_t, wk_t, wv_t, wo_t, gamma2, beta2)

    def build(weight_pipeline_mode):
        w_kw = {} if weight_pipeline_mode is None else dict(pipeline_mode=weight_pipeline_mode)
        # Grid-invariant operands: constant index_map (fetched once) + single buffer.
        w_spec = pl.BlockSpec((D, D), lambda b, i: (0, 0), **w_kw)
        ln_spec = pl.BlockSpec((1, D), lambda b, i: (0, 0), **w_kw)
        q_spec = pl.BlockSpec((1, q_tile, D), lambda b, i: (b, i, 0))
        kv_spec = pl.BlockSpec((1, S, D), lambda b, i: (b, 0, 0))
        if M == 1:
            mask_spec = pl.BlockSpec((1, 1, 1, S), lambda b, i: (b, 0, 0, 0))
        else:
            mask_spec = pl.BlockSpec((1, 1, q_tile, S), lambda b, i: (b, 0, i, 0))

        if self_attention:
            in_specs = [kv_spec, mask_spec, w_spec, w_spec, w_spec, w_spec, ln_spec, ln_spec]
        else:
            in_specs = [q_spec, kv_spec, kv_spec, mask_spec,
                        w_spec, w_spec, w_spec, w_spec, ln_spec, ln_spec]

        return pl.pallas_call(
            kernel,
            out_shape=jax.ShapeDtypeStruct((B, S, D), q.dtype),
            grid_spec=pltpu.PrefetchScalarGridSpec(
                num_scalar_prefetch=0,
                grid=(B, nq),
                in_specs=in_specs,
                out_specs=pl.BlockSpec((1, q_tile, D), lambda b, i: (b, i, 0)),
                scratch_shapes=[pltpu.VMEM((q_tile, D), jnp.float32)],
            ),
            compiler_params=pltpu.CompilerParams(
                dimension_semantics=("parallel", "parallel"),
                vmem_limit_bytes=_pick_vmem_limit(),
            ),
        )

    try:
        # Single-buffer the grid-invariant weights / LN params (halves their VMEM cost).
        return build(pl.Buffered(1))(*inputs)
    except Exception:
        # Fallback for Pallas builds that reject single-buffered pipeline_mode.
        return build(None)(*inputs)


# ----------------------------------------------------------------------------------
# Pure-JAX reference mirroring the PyTorch forward (eval mode)
# ----------------------------------------------------------------------------------
def _reference(q, k, v, pad_mask, params, head_num):
    wq, wk, wv, wo, gamma, beta = params
    B, S, D = q.shape
    d = D // head_num
    residual = q
    qh = (q @ wq.T).reshape(B, S, head_num, d).transpose(0, 2, 1, 3)
    kh = (k @ wk.T).reshape(B, S, head_num, d).transpose(0, 2, 1, 3)
    vh = (v @ wv.T).reshape(B, S, head_num, d).transpose(0, 2, 1, 3)
    att = jnp.einsum('bhqd,bhkd->bhqk', qh, kh) / math.sqrt(d)
    att = att + pad_mask * (-1.0e9)
    att = jax.nn.softmax(att, axis=-1)
    ctx = jnp.einsum('bhqk,bhkd->bhqd', att, vh).transpose(0, 2, 1, 3).reshape(B, S, D)
    out = ctx @ wo.T + residual
    mu = out.mean(-1, keepdims=True)
    var = ((out - mu) ** 2).mean(-1, keepdims=True)
    return (out - mu) / jnp.sqrt(var + 1e-5) * gamma.reshape(1, 1, D) + beta.reshape(1, 1, D)


if __name__ == "__main__":
    B, S, D, H = 2, 8, 32, 4   # batch, seq_len, d_model, head_num

    key = jax.random.PRNGKey(0)
    k_q, k_k, k_v, k_wq, k_wk, k_wv, k_wo = jax.random.split(key, 7)

    q = jax.random.normal(k_q, (B, S, D), dtype=jnp.float32)
    k = jax.random.normal(k_k, (B, S, D), dtype=jnp.float32)
    v = jax.random.normal(k_v, (B, S, D), dtype=jnp.float32)

    init_std = 0.02  # deterministic init mirroring init_param(initializer_range)
    wq = init_std * jax.random.truncated_normal(k_wq, -2.0, 2.0, (D, D), jnp.float32)
    wk = init_std * jax.random.truncated_normal(k_wk, -2.0, 2.0, (D, D), jnp.float32)
    wv = init_std * jax.random.truncated_normal(k_wv, -2.0, 2.0, (D, D), jnp.float32)
    wo = init_std * jax.random.truncated_normal(k_wo, -2.0, 2.0, (D, D), jnp.float32)
    gamma = jnp.ones((D,), dtype=jnp.float32)    # LayerNorm weight
    beta = jnp.zeros((D,), dtype=jnp.float32)    # LayerNorm bias
    params = (wq, wk, wv, wo, gamma, beta)

    # ---- cross-attention path, (B, 1, 1, S) key-padding mask ----
    pad_mask = jnp.zeros((B, 1, 1, S), dtype=jnp.float32)
    pad_mask = pad_mask.at[1, 0, 0, S - 2:].set(1.0)

    out = jax.block_until_ready(
        multi_head_attention(q, k, v, pad_mask, params, head_num=H))
    ref = _reference(q, k, v, pad_mask, params, H)
    assert out.shape == (B, S, D)
    # Tolerance covers bf16 MXU inputs (f32 accumulation) + approx-reciprocal softmax.
    assert jnp.allclose(out, ref, atol=1e-2, rtol=1e-2), \
        f"cross-attention max abs diff {jnp.max(jnp.abs(out - ref))}"

    # ---- self-attention path (q is k is v): single activation DMA, (B,1,S,S) mask ----
    pad_mask_sq = jnp.broadcast_to(pad_mask, (B, 1, S, S))
    out_self = jax.block_until_ready(
        multi_head_attention(q, q, q, pad_mask_sq, params, head_num=H))
    ref_self = _reference(q, q, q, pad_mask_sq, params, H)
    assert jnp.allclose(out_self, ref_self, atol=1e-2, rtol=1e-2), \
        f"self-attention max abs diff {jnp.max(jnp.abs(out_self - ref_self))}"

    print("KERNEL_OK")
</pallas_src>

<mosaic_0001>
module attributes {stable_mosaic.version = 11 : i64} {
  func.func @_mha_cross_kernel(%arg0: i32, %arg1: i32, %arg2: memref<1x8x32xf32, #tpu.memory_space<vmem>>, %arg3: memref<1x8x32xf32, #tpu.memory_space<vmem>>, %arg4: memref<1x8x32xf32, #tpu.memory_space<vmem>>, %arg5: memref<1x1x1x8xi8, #tpu.memory_space<vmem>>, %arg6: memref<32x32xbf16, #tpu.memory_space<vmem>>, %arg7: memref<32x32xbf16, #tpu.memory_space<vmem>>, %arg8: memref<32x32xbf16, #tpu.memory_space<vmem>>, %arg9: memref<32x32xbf16, #tpu.memory_space<vmem>>, %arg10: memref<1x32xf32, #tpu.memory_space<vmem>>, %arg11: memref<1x32xf32, #tpu.memory_space<vmem>>, %arg12: memref<1x8x32xf32, #tpu.memory_space<vmem>>, %arg13: memref<8x32xf32, #tpu.memory_space<vmem>>) attributes {dimension_semantics = [#tpu.dimension_semantics<parallel>, #tpu.dimension_semantics<parallel>], iteration_bounds = array<i64: 2, 1>, scalar_prefetch = 0 : i64, scratch_operands = 1 : i64, tpu.core_type = #tpu.core_type<tc>, window_params = [{transform_indices = @transform_0, window_bounds = array<i64: 1, 8, 32>}, {transform_indices = @transform_1, window_bounds = array<i64: 1, 8, 32>}, {transform_indices = @transform_2, window_bounds = array<i64: 1, 8, 32>}, {transform_indices = @transform_3, window_bounds = array<i64: 1, 1, 1, 8>}, {pipeline_mode = #tpu.pipeline_mode<synchronous>, transform_indices = @transform_4, window_bounds = array<i64: 32, 32>}, {pipeline_mode = #tpu.pipeline_mode<synchronous>, transform_indices = @transform_5, window_bounds = array<i64: 32, 32>}, {pipeline_mode = #tpu.pipeline_mode<synchronous>, transform_indices = @transform_6, window_bounds = array<i64: 32, 32>}, {pipeline_mode = #tpu.pipeline_mode<synchronous>, transform_indices = @transform_7, window_bounds = array<i64: 32, 32>}, {pipeline_mode = #tpu.pipeline_mode<synchronous>, transform_indices = @transform_8, window_bounds = array<i64: 1, 32>}, {pipeline_mode = #tpu.pipeline_mode<synchronous>, transform_indices = @transform_9, window_bounds = array<i64: 1, 32>}, {transform_indices = @transform_10, window_bounds = array<i64: 1, 8, 32>}]} {
    %c0 = arith.constant 0 : index
    %c0_0 = arith.constant 0 : index
    %c0_1 = arith.constant 0 : index
    %0 = vector.load %arg2[%c0, %c0_0, %c0_1] : memref<1x8x32xf32, #tpu.memory_space<vmem>>, vector<1x8x32xf32>
    %1 = vector.shape_cast %0 : vector<1x8x32xf32> to vector<8x32xf32>
    %c0_2 = arith.constant 0 : index
    %c0_3 = arith.constant 0 : index
    %c0_4 = arith.constant 0 : index
    %2 = vector.load %arg3[%c0_2, %c0_3, %c0_4] : memref<1x8x32xf32, #tpu.memory_space<vmem>>, vector<1x8x32xf32>
    %3 = vector.shape_cast %2 : vector<1x8x32xf32> to vector<8x32xf32>
    %c0_5 = arith.constant 0 : index
    %c0_6 = arith.constant 0 : index
    %c0_7 = arith.constant 0 : index
    %4 = vector.load %arg4[%c0_5, %c0_6, %c0_7] : memref<1x8x32xf32, #tpu.memory_space<vmem>>, vector<1x8x32xf32>
    %5 = vector.shape_cast %4 : vector<1x8x32xf32> to vector<8x32xf32>
    %c0_8 = arith.constant 0 : index
    %c0_9 = arith.constant 0 : index
    %c0_10 = arith.constant 0 : index
    %c0_11 = arith.constant 0 : index
    %6 = vector.load %arg5[%c0_8, %c0_9, %c0_10, %c0_11] : memref<1x1x1x8xi8, #tpu.memory_space<vmem>>, vector<1x1x1x8xi8>
    %7 = vector.shape_cast %6 : vector<1x1x1x8xi8> to vector<1x8xi8>
    %8 = arith.sitofp %7 : vector<1x8xi8> to vector<1x8xf32>
    %cst = arith.constant -1.000000e+09 : f32
    %9 = vector.broadcast %cst : f32 to vector<1x8xf32>
    %10 = arith.mulf %8, %9 : vector<1x8xf32>
    %11 = vector.shape_cast %10 : vector<1x8xf32> to vector<1x8xf32>
    %12 = vector.broadcast %11 : vector<1x8xf32> to vector<8x8xf32>
    %13 = arith.truncf %1 : vector<8x32xf32> to vector<8x32xbf16>
    %c0_12 = arith.constant 0 : index
    %c0_13 = arith.constant 0 : index
    %14 = vector.load %arg6[%c0_12, %c0_13] : memref<32x32xbf16, #tpu.memory_space<vmem>>, vector<32x32xbf16>
    %cst_14 = arith.constant dense<0.000000e+00> : vector<8x32xf32>
    %15 = tpu.matmul %13, %14, %cst_14 {dimension_numbers = #tpu.dot_dimension_numbers<[1], [0], [0], [1], [0, 0, 1, 1], [], []>} : vector<8x32xbf16>, vector<32x32xbf16>, vector<8x32xf32> -> vector<8x32xf32>
    %16 = arith.truncf %3 : vector<8x32xf32> to vector<8x32xbf16>
    %c0_15 = arith.constant 0 : index
    %c0_16 = arith.constant 0 : index
    %17 = vector.load %arg7[%c0_15, %c0_16] : memref<32x32xbf16, #tpu.memory_space<vmem>>, vector<32x32xbf16>
    %cst_17 = arith.constant dense<0.000000e+00> : vector<8x32xf32>
    %18 = tpu.matmul %16, %17, %cst_17 {dimension_numbers = #tpu.dot_dimension_numbers<[1], [0], [0], [1], [0, 0, 1, 1], [], []>} : vector<8x32xbf16>, vector<32x32xbf16>, vector<8x32xf32> -> vector<8x32xf32>
    %19 = arith.truncf %5 : vector<8x32xf32> to vector<8x32xbf16>
    %c0_18 = arith.constant 0 : index
    %c0_19 = arith.constant 0 : index
    %20 = vector.load %arg8[%c0_18, %c0_19] : memref<32x32xbf16, #tpu.memory_space<vmem>>, vector<32x32xbf16>
    %cst_20 = arith.constant dense<0.000000e+00> : vector<8x32xf32>
    %21 = tpu.matmul %19, %20, %cst_20 {dimension_numbers = #tpu.dot_dimension_numbers<[1], [0], [0], [1], [0, 0, 1, 1], [], []>} : vector<8x32xbf16>, vector<32x32xbf16>, vector<8x32xf32> -> vector<8x32xf32>
    %22 = arith.truncf %15 : vector<8x32xf32> to vector<8x32xbf16>
    %23 = arith.truncf %18 : vector<8x32xf32> to vector<8x32xbf16>
    %24 = arith.truncf %21 : vector<8x32xf32> to vector<8x32xbf16>
    %25 = vector.extract_strided_slice %22 {offsets = [0, 0], sizes = [8, 8], strides = [1, 1]} : vector<8x32xbf16> to vector<8x8xbf16>
    %26 = vector.extract_strided_slice %23 {offsets = [0, 0], sizes = [8, 8], strides = [1, 1]} : vector<8x32xbf16> to vector<8x8xbf16>
    %cst_21 = arith.constant dense<0.000000e+00> : vector<8x8xf32>
    %27 = tpu.matmul %25, %26, %cst_21 {dimension_numbers = #tpu.dot_dimension_numbers<[1], [1], [0], [0], [0, 0, 1, 0], [], []>} : vector<8x8xbf16>, vector<8x8xbf16>, vector<8x8xf32> -> vector<8x8xf32>
    %28 = arith.addf %27, %12 : vector<8x8xf32>
    %cst_22 = arith.constant dense<0xFF800000> : vector<8xf32>
    %29 = vector.multi_reduction <maximumf>, %28, %cst_22 [1] : vector<8x8xf32> to vector<8xf32>
    %30 = vector.shape_cast %29 : vector<8xf32> to vector<8x1xf32>
    %31 = vector.broadcast %30 : vector<8x1xf32> to vector<8x8xf32>
    %32 = arith.subf %28, %31 : vector<8x8xf32>
    %33 = math.exp %32 : vector<8x8xf32>
    %cst_23 = arith.constant dense<0.000000e+00> : vector<8xf32>
    %34 = vector.multi_reduction <add>, %33, %cst_23 [1] : vector<8x8xf32> to vector<8xf32>
    %35 = vector.shape_cast %34 : vector<8xf32> to vector<8x1xf32>
    %36 = tpu.reciprocal %35 {approx = true} : vector<8x1xf32> -> vector<8x1xf32>
    %37 = vector.broadcast %36 : vector<8x1xf32> to vector<8x8xf32>
    %38 = arith.mulf %33, %37 : vector<8x8xf32>
    %39 = arith.truncf %38 : vector<8x8xf32> to vector<8x8xbf16>
    %40 = vector.extract_strided_slice %24 {offsets = [0, 0], sizes = [8, 8], strides = [1, 1]} : vector<8x32xbf16> to vector<8x8xbf16>
    %cst_24 = arith.constant dense<0.000000e+00> : vector<8x8xf32>
    %41 = tpu.matmul %39, %40, %cst_24 {dimension_numbers = #tpu.dot_dimension_numbers<[1], [0], [0], [1], [0, 0, 1, 1], [], []>} : vector<8x8xbf16>, vector<8x8xbf16>, vector<8x8xf32> -> vector<8x8xf32>
    %c0_25 = arith.constant 0 : index
    %c0_26 = arith.constant 0 : index
    %42 = vector.load %arg13[%c0_25, %c0_26] : memref<8x32xf32, #tpu.memory_space<vmem>>, vector<8x8xf32>
    tpu.vector_store %arg13[%c0_25, %c0_26], %41 {strides = array<i32>} : memref<8x32xf32, #tpu.memory_space<vmem>>, vector<8x8xf32>,
    %43 = vector.extract_strided_slice %22 {offsets = [0, 8], sizes = [8, 8], strides = [1, 1]} : vector<8x32xbf16> to vector<8x8xbf16>
    %44 = vector.extract_strided_slice %23 {offsets = [0, 8], sizes = [8, 8], strides = [1, 1]} : vector<8x32xbf16> to vector<8x8xbf16>
    %cst_27 = arith.constant dense<0.000000e+00> : vector<8x8xf32>
    %45 = tpu.matmul %43, %44, %cst_27 {dimension_numbers = #tpu.dot_dimension_numbers<[1], [1], [0], [0], [0, 0, 1, 0], [], []>} : vector<8x8xbf16>, vector<8x8xbf16>, vector<8x8xf32> -> vector<8x8xf32>
    %46 = arith.addf %45, %12 : vector<8x8xf32>
    %cst_28 = arith.constant dense<0xFF800000> : vector<8xf32>
    %47 = vector.multi_reduction <maximumf>, %46, %cst_28 [1] : vector<8x8xf32> to vector<8xf32>
    %48 = vector.shape_cast %47 : vector<8xf32> to vector<8x1xf32>
    %49 = vector.broadcast %48 : vector<8x1xf32> to vector<8x8xf32>
    %50 = arith.subf %46, %49 : vector<8x8xf32>
    %51 = math.exp %50 : vector<8x8xf32>
    %cst_29 = arith.constant dense<0.000000e+00> : vector<8xf32>
    %52 = vector.multi_reduction <add>, %51, %cst_29 [1] : vector<8x8xf32> to vector<8xf32>
    %53 = vector.shape_cast %52 : vector<8xf32> to vector<8x1xf32>
    %54 = tpu.reciprocal %53 {approx = true} : vector<8x1xf32> -> vector<8x1xf32>
    %55 = vector.broadcast %54 : vector<8x1xf32> to vector<8x8xf32>
    %56 = arith.mulf %51, %55 : vector<8x8xf32>
    %57 = arith.truncf %56 : vector<8x8xf32> to vector<8x8xbf16>
    %58 = vector.extract_strided_slice %24 {offsets = [0, 8], sizes = [8, 8], strides = [1, 1]} : vector<8x32xbf16> to vector<8x8xbf16>
    %cst_30 = arith.constant dense<0.000000e+00> : vector<8x8xf32>
    %59 = tpu.matmul %57, %58, %cst_30 {dimension_numbers = #tpu.dot_dimension_numbers<[1], [0], [0], [1], [0, 0, 1, 1], [], []>} : vector<8x8xbf16>, vector<8x8xbf16>, vector<8x8xf32> -> vector<8x8xf32>
    %c0_31 = arith.constant 0 : index
    %c8 = arith.constant 8 : index
    %60 = vector.load %arg13[%c0_31, %c8] : memref<8x32xf32, #tpu.memory_space<vmem>>, vector<8x8xf32>
    tpu.vector_store %arg13[%c0_31, %c8], %59 {strides = array<i32>} : memref<8x32xf32, #tpu.memory_space<vmem>>, vector<8x8xf32>,
    %61 = vector.extract_strided_slice %22 {offsets = [0, 16], sizes = [8, 8], strides = [1, 1]} : vector<8x32xbf16> to vector<8x8xbf16>
    %62 = vector.extract_strided_slice %23 {offsets = [0, 16], sizes = [8, 8], strides = [1, 1]} : vector<8x32xbf16> to vector<8x8xbf16>
    %cst_32 = arith.constant dense<0.000000e+00> : vector<8x8xf32>
    %63 = tpu.matmul %61, %62, %cst_32 {dimension_numbers = #tpu.dot_dimension_numbers<[1], [1], [0], [0], [0, 0, 1, 0], [], []>} : vector<8x8xbf16>, vector<8x8xbf16>, vector<8x8xf32> -> vector<8x8xf32>
    %64 = arith.addf %63, %12 : vector<8x8xf32>
    %cst_33 = arith.constant dense<0xFF800000> : vector<8xf32>
    %65 = vector.multi_reduction <maximumf>, %64, %cst_33 [1] : vector<8x8xf32> to vector<8xf32>
    %66 = vector.shape_cast %65 : vector<8xf32> to vector<8x1xf32>
    %67 = vector.broadcast %66 : vector<8x1xf32> to vector<8x8xf32>
    %68 = arith.subf %64, %67 : vector<8x8xf32>
    %69 = math.exp %68 : vector<8x8xf32>
    %cst_34 = arith.constant dense<0.000000e+00> : vector<8xf32>
    %70 = vector.multi_reduction <add>, %69, %cst_34 [1] : vector<8x8xf32> to vector<8xf32>
    %71 = vector.shape_cast %70 : vector<8xf32> to vector<8x1xf32>
    %72 = tpu.reciprocal %71 {approx = true} : vector<8x1xf32> -> vector<8x1xf32>
    %73 = vector.broadcast %72 : vector<8x1xf32> to vector<8x8xf32>
    %74 = arith.mulf %69, %73 : vector<8x8xf32>
    %75 = arith.truncf %74 : vector<8x8xf32> to vector<8x8xbf16>
    %76 = vector.extract_strided_slice %24 {offsets = [0, 16], sizes = [8, 8], strides = [1, 1]} : vector<8x32xbf16> to vector<8x8xbf16>
    %cst_35 = arith.constant dense<0.000000e+00> : vector<8x8xf32>
    %77 = tpu.matmul %75, %76, %cst_35 {dimension_numbers = #tpu.dot_dimension_numbers<[1], [0], [0], [1], [0, 0, 1, 1], [], []>} : vector<8x8xbf16>, vector<8x8xbf16>, vector<8x8xf32> -> vector<8x8xf32>
    %c0_36 = arith.constant 0 : index
    %c16 = arith.constant 16 : index
    %78 = vector.load %arg13[%c0_36, %c16] : memref<8x32xf32, #tpu.memory_space<vmem>>, vector<8x8xf32>
    tpu.vector_store %arg13[%c0_36, %c16], %77 {strides = array<i32>} : memref<8x32xf32, #tpu.memory_space<vmem>>, vector<8x8xf32>,
    %79 = vector.extract_strided_slice %22 {offsets = [0, 24], sizes = [8, 8], strides = [1, 1]} : vector<8x32xbf16> to vector<8x8xbf16>
    %80 = vector.extract_strided_slice %23 {offsets = [0, 24], sizes = [8, 8], strides = [1, 1]} : vector<8x32xbf16> to vector<8x8xbf16>
    %cst_37 = arith.constant dense<0.000000e+00> : vector<8x8xf32>
    %81 = tpu.matmul %79, %80, %cst_37 {dimension_numbers = #tpu.dot_dimension_numbers<[1], [1], [0], [0], [0, 0, 1, 0], [], []>} : vector<8x8xbf16>, vector<8x8xbf16>, vector<8x8xf32> -> vector<8x8xf32>
    %82 = arith.addf %81, %12 : vector<8x8xf32>
    %cst_38 = arith.constant dense<0xFF800000> : vector<8xf32>
    %83 = vector.multi_reduction <maximumf>, %82, %cst_38 [1] : vector<8x8xf32> to vector<8xf32>
    %84 = vector.shape_cast %83 : vector<8xf32> to vector<8x1xf32>
    %85 = vector.broadcast %84 : vector<8x1xf32> to vector<8x8xf32>
    %86 = arith.subf %82, %85 : vector<8x8xf32>
    %87 = math.exp %86 : vector<8x8xf32>
    %cst_39 = arith.constant dense<0.000000e+00> : vector<8xf32>
    %88 = vector.multi_reduction <add>, %87, %cst_39 [1] : vector<8x8xf32> to vector<8xf32>
    %89 = vector.shape_cast %88 : vector<8xf32> to vector<8x1xf32>
    %90 = tpu.reciprocal %89 {approx = true} : vector<8x1xf32> -> vector<8x1xf32>
    %91 = vector.broadcast %90 : vector<8x1xf32> to vector<8x8xf32>
    %92 = arith.mulf %87, %91 : vector<8x8xf32>
    %93 = arith.truncf %92 : vector<8x8xf32> to vector<8x8xbf16>
    %94 = vector.extract_strided_slice %24 {offsets = [0, 24], sizes = [8, 8], strides = [1, 1]} : vector<8x32xbf16> to vector<8x8xbf16>
    %cst_40 = arith.constant dense<0.000000e+00> : vector<8x8xf32>
    %95 = tpu.matmul %93, %94, %cst_40 {dimension_numbers = #tpu.dot_dimension_numbers<[1], [0], [0], [1], [0, 0, 1, 1], [], []>} : vector<8x8xbf16>, vector<8x8xbf16>, vector<8x8xf32> -> vector<8x8xf32>
    %c0_41 = arith.constant 0 : index
    %c24 = arith.constant 24 : index
    %96 = vector.load %arg13[%c0_41, %c24] : memref<8x32xf32, #tpu.memory_space<vmem>>, vector<8x8xf32>
    tpu.vector_store %arg13[%c0_41, %c24], %95 {strides = array<i32>} : memref<8x32xf32, #tpu.memory_space<vmem>>, vector<8x8xf32>,
    %c0_42 = arith.constant 0 : index
    %c0_43 = arith.constant 0 : index
    %97 = vector.load %arg13[%c0_42, %c0_43] : memref<8x32xf32, #tpu.memory_space<vmem>>, vector<8x32xf32>
    %98 = arith.truncf %97 : vector<8x32xf32> to vector<8x32xbf16>
    %c0_44 = arith.constant 0 : index
    %c0_45 = arith.constant 0 : index
    %99 = vector.load %arg9[%c0_44, %c0_45] : memref<32x32xbf16, #tpu.memory_space<vmem>>, vector<32x32xbf16>
    %cst_46 = arith.constant dense<0.000000e+00> : vector<8x32xf32>
    %100 = tpu.matmul %98, %99, %cst_46 {dimension_numbers = #tpu.dot_dimension_numbers<[1], [0], [0], [1], [0, 0, 1, 1], [], []>} : vector<8x32xbf16>, vector<32x32xbf16>, vector<8x32xf32> -> vector<8x32xf32>
    %101 = arith.addf %100, %1 : vector<8x32xf32>
    %cst_47 = arith.constant dense<0.000000e+00> : vector<8xf32>
    %102 = vector.multi_reduction <add>, %101, %cst_47 [1] : vector<8x32xf32> to vector<8xf32>
    %103 = vector.shape_cast %102 : vector<8xf32> to vector<8x1xf32>
    %cst_48 = arith.constant 3.200000e+01 : f32
    %104 = vector.broadcast %cst_48 : f32 to vector<8x1xf32>
    %105 = arith.divf %103, %104 : vector<8x1xf32>
    %106 = vector.broadcast %105 : vector<8x1xf32> to vector<8x32xf32>
    %107 = arith.subf %101, %106 : vector<8x32xf32>
    %108 = arith.mulf %107, %107 : vector<8x32xf32>
    %cst_49 = arith.constant dense<0.000000e+00> : vector<8xf32>
    %109 = vector.multi_reduction <add>, %108, %cst_49 [1] : vector<8x32xf32> to vector<8xf32>
    %110 = vector.shape_cast %109 : vector<8xf32> to vector<8x1xf32>
    %cst_50 = arith.constant 3.200000e+01 : f32
    %111 = vector.broadcast %cst_50 : f32 to vector<8x1xf32>
    %112 = arith.divf %110, %111 : vector<8x1xf32>
    %113 = vector.broadcast %105 : vector<8x1xf32> to vector<8x32xf32>
    %114 = arith.subf %101, %113 : vector<8x32xf32>
    %cst_51 = arith.constant 9.99999974E-6 : f32
    %115 = vector.broadcast %cst_51 : f32 to vector<8x1xf32>
    %116 = arith.addf %112, %115 : vector<8x1xf32>
    %117 = math.rsqrt %116 : vector<8x1xf32>
    %118 = vector.broadcast %117 : vector<8x1xf32> to vector<8x32xf32>
    %119 = arith.mulf %114, %118 : vector<8x32xf32>
    %c0_52 = arith.constant 0 : index
    %c0_53 = arith.constant 0 : index
    %120 = vector.load %arg10[%c0_52, %c0_53] : memref<1x32xf32, #tpu.memory_space<vmem>>, vector<1x32xf32>
    %121 = vector.broadcast %120 : vector<1x32xf32> to vector<8x32xf32>
    %122 = arith.mulf %119, %121 : vector<8x32xf32>
    %c0_54 = arith.constant 0 : index
    %c0_55 = arith.constant 0 : index
    %123 = vector.load %arg11[%c0_54, %c0_55] : memref<1x32xf32, #tpu.memory_space<vmem>>, vector<1x32xf32>
    %124 = vector.broadcast %123 : vector<1x32xf32> to vector<8x32xf32>
    %125 = arith.addf %122, %124 : vector<8x32xf32>
    %c0_56 = arith.constant 0 : index
    %c0_57 = arith.constant 0 : index
    %c0_58 = arith.constant 0 : index
    %126 = vector.load %arg12[%c0_56, %c0_57, %c0_58] : memref<1x8x32xf32, #tpu.memory_space<vmem>>, vector<1x8x32xf32>
    %127 = vector.shape_cast %126 : vector<1x8x32xf32> to vector<8x32xf32>
    %128 = vector.shape_cast %125 : vector<8x32xf32> to vector<1x8x32xf32>
    tpu.vector_store %arg12[%c0_56, %c0_57, %c0_58], %128 {strides = array<i32>} : memref<1x8x32xf32, #tpu.memory_space<vmem>>, vector<1x8x32xf32>,
    return
  }
  func.func @transform_0(%arg0: i32, %arg1: i32) -> (i32, i32, i32) {
    %c0_i32 = arith.constant 0 : i32
    %c0_i32_0 = arith.constant 0 : i32
    return %arg0, %arg1, %c0_i32 : i32, i32, i32
  }
  func.func @transform_1(%arg0: i32, %arg1: i32) -> (i32, i32, i32) {
    %c0_i32 = arith.constant 0 : i32
    %c0_i32_0 = arith.constant 0 : i32
    %c0_i32_1 = arith.constant 0 : i32
    return %arg0, %c0_i32, %c0_i32_0 : i32, i32, i32
  }
  func.func @transform_2(%arg0: i32, %arg1: i32) -> (i32, i32, i32) {
    %c0_i32 = arith.constant 0 : i32
    %c0_i32_0 = arith.constant 0 : i32
    %c0_i32_1 = arith.constant 0 : i32
    return %arg0, %c0_i32, %c0_i32_0 : i32, i32, i32
  }
  func.func @transform_3(%arg0: i32, %arg1: i32) -> (i32, i32, i32, i32) {
    %c0_i32 = arith.constant 0 : i32
    %c0_i32_0 = arith.constant 0 : i32
    %c0_i32_1 = arith.constant 0 : i32
    %c0_i32_2 = arith.constant 0 : i32
    return %arg0, %c0_i32, %c0_i32_0, %c0_i32_1 : i32, i32, i32, i32
  }
  func.func @transform_4(%arg0: i32, %arg1: i32) -> (i32, i32) {
    %c0_i32 = arith.constant 0 : i32
    %c0_i32_0 = arith.constant 0 : i32
    %c0_i32_1 = arith.constant 0 : i32
    return %c0_i32, %c0_i32_0 : i32, i32
  }
  func.func @transform_5(%arg0: i32, %arg1: i32) -> (i32, i32) {
    %c0_i32 = arith.constant 0 : i32
    %c0_i32_0 = arith.constant 0 : i32
    %c0_i32_1 = arith.constant 0 : i32
    return %c0_i32, %c0_i32_0 : i32, i32
  }
  func.func @transform_6(%arg0: i32, %arg1: i32) -> (i32, i32) {
    %c0_i32 = arith.constant 0 : i32
    %c0_i32_0 = arith.constant 0 : i32
    %c0_i32_1 = arith.constant 0 : i32
    return %c0_i32, %c0_i32_0 : i32, i32
  }
  func.func @transform_7(%arg0: i32, %arg1: i32) -> (i32, i32) {
    %c0_i32 = arith.constant 0 : i32
    %c0_i32_0 = arith.constant 0 : i32
    %c0_i32_1 = arith.constant 0 : i32
    return %c0_i32, %c0_i32_0 : i32, i32
  }
  func.func @transform_8(%arg0: i32, %arg1: i32) -> (i32, i32) {
    %c0_i32 = arith.constant 0 : i32
    %c0_i32_0 = arith.constant 0 : i32
    %c0_i32_1 = arith.constant 0 : i32
    return %c0_i32, %c0_i32_0 : i32, i32
  }
  func.func @transform_9(%arg0: i32, %arg1: i32) -> (i32, i32) {
    %c0_i32 = arith.constant 0 : i32
    %c0_i32_0 = arith.constant 0 : i32
    %c0_i32_1 = arith.constant 0 : i32
    return %c0_i32, %c0_i32_0 : i32, i32
  }
  func.func @transform_10(%arg0: i32, %arg1: i32) -> (i32, i32, i32) {
    %c0_i32 = arith.constant 0 : i32
    %c0_i32_0 = arith.constant 0 : i32
    return %arg0, %arg1, %c0_i32 : i32, i32, i32
  }
}

module attributes {stable_mosaic.version = 11 : i64} {
  func.func @_mha_cross_kernel(%arg0: i32, %arg1: i32, %arg2: memref<1x8x32xf32, #tpu.memory_space<vmem>>, %arg3: memref<1x8x32xf32, #tpu.memory_space<vmem>>, %arg4: memref<1x8x32xf32, #tpu.memory_space<vmem>>, %arg5: memref<1x1x1x8xi8, #tpu.memory_space<vmem>>, %arg6: memref<32x32xbf16, #tpu.memory_space<vmem>>, %arg7: memref<32x32xbf16, #tpu.memory_space<vmem>>, %arg8: memref<32x32xbf16, #tpu.memory_space<vmem>>, %arg9: memref<32x32xbf16, #tpu.memory_space<vmem>>, %arg10: memref<1x32xf32, #tpu.memory_space<vmem>>, %arg11: memref<1x32xf32, #tpu.memory_space<vmem>>, %arg12: memref<1x8x32xf32, #tpu.memory_space<vmem>>, %arg13: memref<8x32xf32, #tpu.memory_space<vmem>>) attributes {dimension_semantics = [#tpu.dimension_semantics<parallel>, #tpu.dimension_semantics<parallel>], iteration_bounds = array<i64: 2, 1>, scalar_prefetch = 0 : i64, scratch_operands = 1 : i64, tpu.core_type = #tpu.core_type<tc>, window_params = [{transform_indices = @transform_0, window_bounds = array<i64: 1, 8, 32>}, {transform_indices = @transform_1, window_bounds = array<i64: 1, 8, 32>}, {transform_indices = @transform_2, window_bounds = array<i64: 1, 8, 32>}, {transform_indices = @transform_3, window_bounds = array<i64: 1, 1, 1, 8>}, {pipeline_mode = #tpu.pipeline_mode<synchronous>, transform_indices = @transform_4, window_bounds = array<i64: 32, 32>}, {pipeline_mode = #tpu.pipeline_mode<synchronous>, transform_indices = @transform_5, window_bounds = array<i64: 32, 32>}, {pipeline_mode = #tpu.pipeline_mode<synchronous>, transform_indices = @transform_6, window_bounds = array<i64: 32, 32>}, {pipeline_mode = #tpu.pipeline_mode<synchronous>, transform_indices = @transform_7, window_bounds = array<i64: 32, 32>}, {pipeline_mode = #tpu.pipeline_mode<synchronous>, transform_indices = @transform_8, window_bounds = array<i64: 1, 32>}, {pipeline_mode = #tpu.pipeline_mode<synchronous>, transform_indices = @transform_9, window_bounds = array<i64: 1, 32>}, {transform_indices = @transform_10, window_bounds = array<i64: 1, 8, 32>}]} {
    %c0 = arith.constant 0 : index
    %c0_0 = arith.constant 0 : index
    %c0_1 = arith.constant 0 : index
    %0 = vector.load %arg2[%c0, %c0_0, %c0_1] : memref<1x8x32xf32, #tpu.memory_space<vmem>>, vector<1x8x32xf32>
    %1 = vector.shape_cast %0 : vector<1x8x32xf32> to vector<8x32xf32>
    %c0_2 = arith.constant 0 : index
    %c0_3 = arith.constant 0 : index
    %c0_4 = arith.constant 0 : index
    %2 = vector.load %arg3[%c0_2, %c0_3, %c0_4] : memref<1x8x32xf32, #tpu.memory_space<vmem>>, vector<1x8x32xf32>
    %3 = vector.shape_cast %2 : vector<1x8x32xf32> to vector<8x32xf32>
    %c0_5 = arith.constant 0 : index
    %c0_6 = arith.constant 0 : index
    %c0_7 = arith.constant 0 : index
    %4 = vector.load %arg4[%c0_5, %c0_6, %c0_7] : memref<1x8x32xf32, #tpu.memory_space<vmem>>, vector<1x8x32xf32>
    %5 = vector.shape_cast %4 : vector<1x8x32xf32> to vector<8x32xf32>
    %c0_8 = arith.constant 0 : index
    %c0_9 = arith.constant 0 : index
    %c0_10 = arith.constant 0 : index
    %c0_11 = arith.constant 0 : index
    %6 = vector.load %arg5[%c0_8, %c0_9, %c0_10, %c0_11] : memref<1x1x1x8xi8, #tpu.memory_space<vmem>>, vector<1x1x1x8xi8>
    %7 = vector.shape_cast %6 : vector<1x1x1x8xi8> to vector<1x8xi8>
    %8 = arith.sitofp %7 : vector<1x8xi8> to vector<1x8xf32>
    %cst = arith.constant -1.000000e+09 : f32
    %9 = vector.broadcast %cst : f32 to vector<1x8xf32>
    %10 = arith.mulf %8, %9 : vector<1x8xf32>
    %11 = vector.shape_cast %10 : vector<1x8xf32> to vector<1x8xf32>
    %12 = vector.broadcast %11 : vector<1x8xf32> to vector<8x8xf32>
    %13 = arith.truncf %1 : vector<8x32xf32> to vector<8x32xbf16>
    %c0_12 = arith.constant 0 : index
    %c0_13 = arith.constant 0 : index
    %14 = vector.load %arg6[%c0_12, %c0_13] : memref<32x32xbf16, #tpu.memory_space<vmem>>, vector<32x32xbf16>
    %cst_14 = arith.constant dense<0.000000e+00> : vector<8x32xf32>
    %15 = tpu.matmul %13, %14, %cst_14 {dimension_numbers = #tpu.dot_dimension_numbers<[1], [0], [0], [1], [0, 0, 1, 1], [], []>} : vector<8x32xbf16>, vector<32x32xbf16>, vector<8x32xf32> -> vector<8x32xf32>
    %16 = arith.truncf %3 : vector<8x32xf32> to vector<8x32xbf16>
    %c0_15 = arith.constant 0 : index
    %c0_16 = arith.constant 0 : index
    %17 = vector.load %arg7[%c0_15, %c0_16] : memref<32x32xbf16, #tpu.memory_space<vmem>>, vector<32x32xbf16>
    %cst_17 = arith.constant dense<0.000000e+00> : vector<8x32xf32>
    %18 = tpu.matmul %16, %17, %cst_17 {dimension_numbers = #tpu.dot_dimension_numbers<[1], [0], [0], [1], [0, 0, 1, 1], [], []>} : vector<8x32xbf16>, vector<32x32xbf16>, vector<8x32xf32> -> vector<8x32xf32>
    %19 = arith.truncf %5 : vector<8x32xf32> to vector<8x32xbf16>
    %c0_18 = arith.constant 0 : index
    %c0_19 = arith.constant 0 : index
    %20 = vector.load %arg8[%c0_18, %c0_19] : memref<32x32xbf16, #tpu.memory_space<vmem>>, vector<32x32xbf16>
    %cst_20 = arith.constant dense<0.000000e+00> : vector<8x32xf32>
    %21 = tpu.matmul %19, %20, %cst_20 {dimension_numbers = #tpu.dot_dimension_numbers<[1], [0], [0], [1], [0, 0, 1, 1], [], []>} : vector<8x32xbf16>, vector<32x32xbf16>, vector<8x32xf32> -> vector<8x32xf32>
    %22 = arith.truncf %15 : vector<8x32xf32> to vector<8x32xbf16>
    %23 = arith.truncf %18 : vector<8x32xf32> to vector<8x32xbf16>
    %24 = arith.truncf %21 : vector<8x32xf32> to vector<8x32xbf16>
    %25 = vector.extract_strided_slice %22 {offsets = [0, 0], sizes = [8, 8], strides = [1, 1]} : vector<8x32xbf16> to vector<8x8xbf16>
    %26 = vector.extract_strided_slice %23 {offsets = [0, 0], sizes = [8, 8], strides = [1, 1]} : vector<8x32xbf16> to vector<8x8xbf16>
    %cst_21 = arith.constant dense<0.000000e+00> : vector<8x8xf32>
    %27 = tpu.matmul %25, %26, %cst_21 {dimension_numbers = #tpu.dot_dimension_numbers<[1], [1], [0], [0], [0, 0, 1, 0], [], []>} : vector<8x8xbf16>, vector<8x8xbf16>, vector<8x8xf32> -> vector<8x8xf32>
    %28 = arith.addf %27, %12 : vector<8x8xf32>
    %cst_22 = arith.constant dense<0xFF800000> : vector<8xf32>
    %29 = vector.multi_reduction <maximumf>, %28, %cst_22 [1] : vector<8x8xf32> to vector<8xf32>
    %30 = vector.shape_cast %29 : vector<8xf32> to vector<8x1xf32>
    %31 = vector.broadcast %30 : vector<8x1xf32> to vector<8x8xf32>
    %32 = arith.subf %28, %31 : vector<8x8xf32>
    %33 = math.exp %32 : vector<8x8xf32>
    %cst_23 = arith.constant dense<0.000000e+00> : vector<8xf32>
    %34 = vector.multi_reduction <add>, %33, %cst_23 [1] : vector<8x8xf32> to vector<8xf32>
    %35 = vector.shape_cast %34 : vector<8xf32> to vector<8x1xf32>
    %36 = tpu.reciprocal %35 {approx = true} : vector<8x1xf32> -> vector<8x1xf32>
    %37 = vector.broadcast %36 : vector<8x1xf32> to vector<8x8xf32>
    %38 = arith.mulf %33, %37 : vector<8x8xf32>
    %39 = arith.truncf %38 : vector<8x8xf32> to vector<8x8xbf16>
    %40 = vector.extract_strided_slice %24 {offsets = [0, 0], sizes = [8, 8], strides = [1, 1]} : vector<8x32xbf16> to vector<8x8xbf16>
    %cst_24 = arith.constant dense<0.000000e+00> : vector<8x8xf32>
    %41 = tpu.matmul %39, %40, %cst_24 {dimension_numbers = #tpu.dot_dimension_numbers<[1], [0], [0], [1], [0, 0, 1, 1], [], []>} : vector<8x8xbf16>, vector<8x8xbf16>, vector<8x8xf32> -> vector<8x8xf32>
    %c0_25 = arith.constant 0 : index
    %c0_26 = arith.constant 0 : index
    %42 = vector.load %arg13[%c0_25, %c0_26] : memref<8x32xf32, #tpu.memory_space<vmem>>, vector<8x8xf32>
    tpu.vector_store %arg13[%c0_25, %c0_26], %41 {strides = array<i32>} : memref<8x32xf32, #tpu.memory_space<vmem>>, vector<8x8xf32>,
    %43 = vector.extract_strided_slice %22 {offsets = [0, 8], sizes = [8, 8], strides = [1, 1]} : vector<8x32xbf16> to vector<8x8xbf16>
    %44 = vector.extract_strided_slice %23 {offsets = [0, 8], sizes = [8, 8], strides = [1, 1]} : vector<8x32xbf16> to vector<8x8xbf16>
    %cst_27 = arith.constant dense<0.000000e+00> : vector<8x8xf32>
    %45 = tpu.matmul %43, %44, %cst_27 {dimension_numbers = #tpu.dot_dimension_numbers<[1], [1], [0], [0], [0, 0, 1, 0], [], []>} : vector<8x8xbf16>, vector<8x8xbf16>, vector<8x8xf32> -> vector<8x8xf32>
    %46 = arith.addf %45, %12 : vector<8x8xf32>
    %cst_28 = arith.constant dense<0xFF800000> : vector<8xf32>
    %47 = vector.multi_reduction <maximumf>, %46, %cst_28 [1] : vector<8x8xf32> to vector<8xf32>
    %48 = vector.shape_cast %47 : vector<8xf32> to vector<8x1xf32>
    %49 = vector.broadcast %48 : vector<8x1xf32> to vector<8x8xf32>
    %50 = arith.subf %46, %49 : vector<8x8xf32>
    %51 = math.exp %50 : vector<8x8xf32>
    %cst_29 = arith.constant dense<0.000000e+00> : vector<8xf32>
    %52 = vector.multi_reduction <add>, %51, %cst_29 [1] : vector<8x8xf32> to vector<8xf32>
    %53 = vector.shape_cast %52 : vector<8xf32> to vector<8x1xf32>
    %54 = tpu.reciprocal %53 {approx = true} : vector<8x1xf32> -> vector<8x1xf32>
    %55 = vector.broadcast %54 : vector<8x1xf32> to vector<8x8xf32>
    %56 = arith.mulf %51, %55 : vector<8x8xf32>
    %57 = arith.truncf %56 : vector<8x8xf32> to vector<8x8xbf16>
    %58 = vector.extract_strided_slice %24 {offsets = [0, 8], sizes = [8, 8], strides = [1, 1]} : vector<8x32xbf16> to vector<8x8xbf16>
    %cst_30 = arith.constant dense<0.000000e+00> : vector<8x8xf32>
    %59 = tpu.matmul %57, %58, %cst_30 {dimension_numbers = #tpu.dot_dimension_numbers<[1], [0], [0], [1], [0, 0, 1, 1], [], []>} : vector<8x8xbf16>, vector<8x8xbf16>, vector<8x8xf32> -> vector<8x8xf32>
    %c0_31 = arith.constant 0 : index
    %c8 = arith.constant 8 : index
    %60 = vector.load %arg13[%c0_31, %c8] : memref<8x32xf32, #tpu.memory_space<vmem>>, vector<8x8xf32>
    tpu.vector_store %arg13[%c0_31, %c8], %59 {strides = array<i32>} : memref<8x32xf32, #tpu.memory_space<vmem>>, vector<8x8xf32>,
    %61 = vector.extract_strided_slice %22 {offsets = [0, 16], sizes = [8, 8], strides = [1, 1]} : vector<8x32xbf16> to vector<8x8xbf16>
    %62 = vector.extract_strided_slice %23 {offsets = [0, 16], sizes = [8, 8], strides = [1, 1]} : vector<8x32xbf16> to vector<8x8xbf16>
    %cst_32 = arith.constant dense<0.000000e+00> : vector<8x8xf32>
    %63 = tpu.matmul %61, %62, %cst_32 {dimension_numbers = #tpu.dot_dimension_numbers<[1], [1], [0], [0], [0, 0, 1, 0], [], []>} : vector<8x8xbf16>, vector<8x8xbf16>, vector<8x8xf32> -> vector<8x8xf32>
    %64 = arith.addf %63, %12 : vector<8x8xf32>
    %cst_33 = arith.constant dense<0xFF800000> : vector<8xf32>
    %65 = vector.multi_reduction <maximumf>, %64, %cst_33 [1] : vector<8x8xf32> to vector<8xf32>
    %66 = vector.shape_cast %65 : vector<8xf32> to vector<8x1xf32>
    %67 = vector.broadcast %66 : vector<8x1xf32> to vector<8x8xf32>
    %68 = arith.subf %64, %67 : vector<8x8xf32>
    %69 = math.exp %68 : vector<8x8xf32>
    %cst_34 = arith.constant dense<0.000000e+00> : vector<8xf32>
    %70 = vector.multi_reduction <add>, %69, %cst_34 [1] : vector<8x8xf32> to vector<8xf32>
    %71 = vector.shape_cast %70 : vector<8xf32> to vector<8x1xf32>
    %72 = tpu.reciprocal %71 {approx = true} : vector<8x1xf32> -> vector<8x1xf32>
    %73 = vector.broadcast %72 : vector<8x1xf32> to vector<8x8xf32>
    %74 = arith.mulf %69, %73 : vector<8x8xf32>
    %75 = arith.truncf %74 : vector<8x8xf32> to vector<8x8xbf16>
    %76 = vector.extract_strided_slice %24 {offsets = [0, 16], sizes = [8, 8], strides = [1, 1]} : vector<8x32xbf16> to vector<8x8xbf16>
    %cst_35 = arith.constant dense<0.000000e+00> : vector<8x8xf32>
    %77 = tpu.matmul %75, %76, %cst_35 {dimension_numbers = #tpu.dot_dimension_numbers<[1], [0], [0], [1], [0, 0, 1, 1], [], []>} : vector<8x8xbf16>, vector<8x8xbf16>, vector<8x8xf32> -> vector<8x8xf32>
    %c0_36 = arith.constant 0 : index
    %c16 = arith.constant 16 : index
    %78 = vector.load %arg13[%c0_36, %c16] : memref<8x32xf32, #tpu.memory_space<vmem>>, vector<8x8xf32>
    tpu.vector_store %arg13[%c0_36, %c16], %77 {strides = array<i32>} : memref<8x32xf32, #tpu.memory_space<vmem>>, vector<8x8xf32>,
    %79 = vector.extract_strided_slice %22 {offsets = [0, 24], sizes = [8, 8], strides = [1, 1]} : vector<8x32xbf16> to vector<8x8xbf16>
    %80 = vector.extract_strided_slice %23 {offsets = [0, 24], sizes = [8, 8], strides = [1, 1]} : vector<8x32xbf16> to vector<8x8xbf16>
    %cst_37 = arith.constant dense<0.000000e+00> : vector<8x8xf32>
    %81 = tpu.matmul %79, %80, %cst_37 {dimension_numbers = #tpu.dot_dimension_numbers<[1], [1], [0], [0], [0, 0, 1, 0], [], []>} : vector<8x8xbf16>, vector<8x8xbf16>, vector<8x8xf32> -> vector<8x8xf32>
    %82 = arith.addf %81, %12 : vector<8x8xf32>
    %cst_38 = arith.constant dense<0xFF800000> : vector<8xf32>
    %83 = vector.multi_reduction <maximumf>, %82, %cst_38 [1] : vector<8x8xf32> to vector<8xf32>
    %84 = vector.shape_cast %83 : vector<8xf32> to vector<8x1xf32>
    %85 = vector.broadcast %84 : vector<8x1xf32> to vector<8x8xf32>
    %86 = arith.subf %82, %85 : vector<8x8xf32>
    %87 = math.exp %86 : vector<8x8xf32>
    %cst_39 = arith.constant dense<0.000000e+00> : vector<8xf32>
    %88 = vector.multi_reduction <add>, %87, %cst_39 [1] : vector<8x8xf32> to vector<8xf32>
    %89 = vector.shape_cast %88 : vector<8xf32> to vector<8x1xf32>
    %90 = tpu.reciprocal %89 {approx = true} : vector<8x1xf32> -> vector<8x1xf32>
    %91 = vector.broadcast %90 : vector<8x1xf32> to vector<8x8xf32>
    %92 = arith.mulf %87, %91 : vector<8x8xf32>
    %93 = arith.truncf %92 : vector<8x8xf32> to vector<8x8xbf16>
    %94 = vector.extract_strided_slice %24 {offsets = [0, 24], sizes = [8, 8], strides = [1, 1]} : vector<8x32xbf16> to vector<8x8xbf16>
    %cst_40 = arith.constant dense<0.000000e+00> : vector<8x8xf32>
    %95 = tpu.matmul %93, %94, %cst_40 {dimension_numbers = #tpu.dot_dimension_numbers<[1], [0], [0], [1], [0, 0, 1, 1], [], []>} : vector<8x8xbf16>, vector<8x8xbf16>, vector<8x8xf32> -> vector<8x8xf32>
    %c0_41 = arith.constant 0 : index
    %c24 = arith.constant 24 : index
    %96 = vector.load %arg13[%c0_41, %c24] : memref<8x32xf32, #tpu.memory_space<vmem>>, vector<8x8xf32>
    tpu.vector_store %arg13[%c0_41, %c24], %95 {strides = array<i32>} : memref<8x32xf32, #tpu.memory_space<vmem>>, vector<8x8xf32>,
    %c0_42 = arith.constant 0 : index
    %c0_43 = arith.constant 0 : index
    %97 = vector.load %arg13[%c0_42, %c0_43] : memref<8x32xf32, #tpu.memory_space<vmem>>, vector<8x32xf32>
    %98 = arith.truncf %97 : vector<8x32xf32> to vector<8x32xbf16>
    %c0_44 = arith.constant 0 : index
    %c0_45 = arith.constant 0 : index
    %99 = vector.load %arg9[%c0_44, %c0_45] : memref<32x32xbf16, #tpu.memory_space<vmem>>, vector<32x32xbf16>
    %cst_46 = arith.constant dense<0.000000e+00> : vector<8x32xf32>
    %100 = tpu.matmul %98, %99, %cst_46 {dimension_numbers = #tpu.dot_dimension_numbers<[1], [0], [0], [1], [0, 0, 1, 1], [], []>} : vector<8x32xbf16>, vector<32x32xbf16>, vector<8x32xf32> -> vector<8x32xf32>
    %101 = arith.addf %100, %1 : vector<8x32xf32>
    %cst_47 = arith.constant dense<0.000000e+00> : vector<8xf32>
    %102 = vector.multi_reduction <add>, %101, %cst_47 [1] : vector<8x32xf32> to vector<8xf32>
    %103 = vector.shape_cast %102 : vector<8xf32> to vector<8x1xf32>
    %cst_48 = arith.constant 3.200000e+01 : f32
    %104 = vector.broadcast %cst_48 : f32 to vector<8x1xf32>
    %105 = arith.divf %103, %104 : vector<8x1xf32>
    %106 = vector.broadcast %105 : vector<8x1xf32> to vector<8x32xf32>
    %107 = arith.subf %101, %106 : vector<8x32xf32>
    %108 = arith.mulf %107, %107 : vector<8x32xf32>
    %cst_49 = arith.constant dense<0.000000e+00> : vector<8xf32>
    %109 = vector.multi_reduction <add>, %108, %cst_49 [1] : vector<8x32xf32> to vector<8xf32>
    %110 = vector.shape_cast %109 : vector<8xf32> to vector<8x1xf32>
    %cst_50 = arith.constant 3.200000e+01 : f32
    %111 = vector.broadcast %cst_50 : f32 to vector<8x1xf32>
    %112 = arith.divf %110, %111 : vector<8x1xf32>
    %113 = vector.broadcast %105 : vector<8x1xf32> to vector<8x32xf32>
    %114 = arith.subf %101, %113 : vector<8x32xf32>
    %cst_51 = arith.constant 9.99999974E-6 : f32
    %115 = vector.broadcast %cst_51 : f32 to vector<8x1xf32>
    %116 = arith.addf %112, %115 : vector<8x1xf32>
    %117 = math.rsqrt %116 : vector<8x1xf32>
    %118 = vector.broadcast %117 : vector<8x1xf32> to vector<8x32xf32>
    %119 = arith.mulf %114, %118 : vector<8x32xf32>
    %c0_52 = arith.constant 0 : index
    %c0_53 = arith.constant 0 : index
    %120 = vector.load %arg10[%c0_52, %c0_53] : memref<1x32xf32, #tpu.memory_space<vmem>>, vector<1x32xf32>
    %121 = vector.broadcast %120 : vector<1x32xf32> to vector<8x32xf32>
    %122 = arith.mulf %119, %121 : vector<8x32xf32>
    %c0_54 = arith.constant 0 : index
    %c0_55 = arith.constant 0 : index
    %123 = vector.load %arg11[%c0_54, %c0_55] : memref<1x32xf32, #tpu.memory_space<vmem>>, vector<1x32xf32>
    %124 = vector.broadcast %123 : vector<1x32xf32> to vector<8x32xf32>
    %125 = arith.addf %122, %124 : vector<8x32xf32>
    %c0_56 = arith.constant 0 : index
    %c0_57 = arith.constant 0 : index
    %c0_58 = arith.constant 0 : index
    %126 = vector.load %arg12[%c0_56, %c0_57, %c0_58] : memref<1x8x32xf32, #tpu.memory_space<vmem>>, vector<1x8x32xf32>
    %127 = vector.shape_cast %126 : vector<1x8x32xf32> to vector<8x32xf32>
    %128 = vector.shape_cast %125 : vector<8x32xf32> to vector<1x8x32xf32>
    tpu.vector_store %arg12[%c0_56, %c0_57, %c0_58], %128 {strides = array<i32>} : memref<1x8x32xf32, #tpu.memory_space<vmem>>, vector<1x8x32xf32>,
    return
  }
  func.func @transform_0(%arg0: i32, %arg1: i32) -> (i32, i32, i32) {
    %c0_i32 = arith.constant 0 : i32
    %c0_i32_0 = arith.constant 0 : i32
    return %arg0, %arg1, %c0_i32 : i32, i32, i32
  }
  func.func @transform_1(%arg0: i32, %arg1: i32) -> (i32, i32, i32) {
    %c0_i32 = arith.constant 0 : i32
    %c0_i32_0 = arith.constant 0 : i32
    %c0_i32_1 = arith.constant 0 : i32
    return %arg0, %c0_i32, %c0_i32_0 : i32, i32, i32
  }
  func.func @transform_2(%arg0: i32, %arg1: i32) -> (i32, i32, i32) {
    %c0_i32 = arith.constant 0 : i32
    %c0_i32_0 = arith.constant 0 : i32
    %c0_i32_1 = arith.constant 0 : i32
    return %arg0, %c0_i32, %c0_i32_0 : i32, i32, i32
  }
  func.func @transform_3(%arg0: i32, %arg1: i32) -> (i32, i32, i32, i32) {
    %c0_i32 = arith.constant 0 : i32
    %c0_i32_0 = arith.constant 0 : i32
    %c0_i32_1 = arith.constant 0 : i32
    %c0_i32_2 = arith.constant 0 : i32
    return %arg0, %c0_i32, %c0_i32_0, %c0_i32_1 : i32, i32, i32, i32
  }
  func.func @transform_4(%arg0: i32, %arg1: i32) -> (i32, i32) {
    %c0_i32 = arith.constant 0 : i32
    %c0_i32_0 = arith.constant 0 : i32
    %c0_i32_1 = arith.constant 0 : i32
    return %c0_i32, %c0_i32_0 : i32, i32
  }
  func.func @transform_5(%arg0: i32, %arg1: i32) -> (i32, i32) {
    %c0_i32 = arith.constant 0 : i32
    %c0_i32_0 = arith.constant 0 : i32
    %c0_i32_1 = arith.constant 0 : i32
    return %c0_i32, %c0_i32_0 : i32, i32
  }
  func.func @transform_6(%arg0: i32, %arg1: i32) -> (i32, i32) {
    %c0_i32 = arith.constant 0 : i32
    %c0_i32_0 = arith.constant 0 : i32
    %c0_i32_1 = arith.constant 0 : i32
    return %c0_i32, %c0_i32_0 : i32, i32
  }
  func.func @transform_7(%arg0: i32, %arg1: i32) -> (i32, i32) {
    %c0_i32 = arith.constant 0 : i32
    %c0_i32_0 = arith.constant 0 : i32
    %c0_i32_1 = arith.constant 0 : i32
    return %c0_i32, %c0_i32_0 : i32, i32
  }
  func.func @transform_8(%arg0: i32, %arg1: i32) -> (i32, i32) {
    %c0_i32 = arith.constant 0 : i32
    %c0_i32_0 = arith.constant 0 : i32
    %c0_i32_1 = arith.constant 0 : i32
    return %c0_i32, %c0_i32_0 : i32, i32
  }
  func.func @transform_9(%arg0: i32, %arg1: i32) -> (i32, i32) {
    %c0_i32 = arith.constant 0 : i32
    %c0_i32_0 = arith.constant 0 : i32
    %c0_i32_1 = arith.constant 0 : i32
    return %c0_i32, %c0_i32_0 : i32, i32
  }
  func.func @transform_10(%arg0: i32, %arg1: i32) -> (i32, i32, i32) {
    %c0_i32 = arith.constant 0 : i32
    %c0_i32_0 = arith.constant 0 : i32
    return %arg0, %arg1, %c0_i32 : i32, i32, i32
  }
}

</mosaic_0001>

<llo_original>
// kernel: tpu_custom_call.1
$region0: #{tpu_custom_call.1}
  #allocation0 [shape = 'u32[]', space=smem, size = 0x4, offset = 0x4, fixed_abs, tag = 'smem constant byte address 0x4 - core index']
  #allocation1 [shape = 'u32[72,128]{1,0:T(1,128)}', space=vmem, size = 0x9000, scoped, tag = 'internal scratch']
  #allocation2 [shape = 'f32[8,32]{1,0:T(8,128)}', space=vmem, size = 0x1000, scoped, tag = 'scratch operand']
  %s0 = inlined_call_operand.hbm [shape: f32[2,8,32], index: 0, kind: input, shape index: {}]
  %s1 = inlined_call_operand.hbm [shape: f32[2,8,32], index: 1, kind: input, shape index: {}]
  %s2 = inlined_call_operand.hbm [shape: f32[2,8,32], index: 2, kind: input, shape index: {}]
  %s3 = inlined_call_operand.vmem [shape: s8[2,1,1,8], index: 3, kind: input, shape index: {}]
  %s4 = inlined_call_operand.hbm [shape: bf16[32,32], index: 4, kind: input, shape index: {}]
  %s5 = inlined_call_operand.hbm [shape: bf16[32,32], index: 5, kind: input, shape index: {}]
  %s6 = inlined_call_operand.hbm [shape: bf16[32,32], index: 6, kind: input, shape index: {}]
  %s7 = inlined_call_operand.hbm [shape: bf16[32,32], index: 7, kind: input, shape index: {}]
  %s8 = inlined_call_operand.vmem [shape: f32[1,32], index: 8, kind: input, shape index: {}]
  %s9 = inlined_call_operand.vmem [shape: f32[1,32], index: 9, kind: input, shape index: {}]
  %s10 = inlined_call_operand.hbm [shape: f32[2,8,32], index: 10, kind: output, shape index: {}]
  %s11 = sld [smem:[#allocation0]]
  $region101: #{tpu_custom_call.1} parent=0
    _
  %s13 = ssub.s32 1, %s11
  %s14 = scalar_select 0, %s13, %s11
  $region1: #{tpu_custom_call.1} parent=0
    #allocation3 [shape = 'u8[8192]{0}', space=vmem, size = 0x2000, scoped, tag = 'input window, operand 0']
    #allocation4 [shape = 's32[2]{0}', space=sflag, size = 0x8, scoped, tag = 'scoped memory for tpu_custom_call.1']
    #allocation5 [shape = 's32[2]{0}', space=sflag, size = 0x8, scoped, tag = 'scoped memory for tpu_custom_call.1']
    #allocation6 [shape = 'u8[8192]{0}', space=vmem, size = 0x2000, scoped, tag = 'input window, operand 1']
    #allocation7 [shape = 's32[2]{0}', space=sflag, size = 0x8, scoped, tag = 'scoped memory for tpu_custom_call.1']
    #allocation8 [shape = 'u8[8192]{0}', space=vmem, size = 0x2000, scoped, tag = 'input window, operand 2']
    #allocation9 [shape = 'u8[8192]{0}', space=vmem, size = 0x2000, scoped, tag = 'input window, operand 4, single buffered']
    #allocation10 [shape = 's32[1]{0}', space=sflag, size = 0x4, scoped, tag = 'scoped memory for tpu_custom_call.1']
    #allocation11 [shape = 'u8[8192]{0}', space=vmem, size = 0x2000, scoped, tag = 'input window, operand 5, single buffered']
    #allocation12 [shape = 'u8[8192]{0}', space=vmem, size = 0x2000, scoped, tag = 'input window, operand 6, single buffered']
    #allocation13 [shape = 's32[1]{0}', space=sflag, size = 0x4, scoped, tag = 'scoped memory for tpu_custom_call.1']
    #allocation14 [shape = 'u8[8192]{0}', space=vmem, size = 0x2000, scoped, tag = 'input window, operand 7, single buffered']
    #allocation15 [shape = 'u8[8192]{0}', space=vmem, size = 0x2000, scoped, tag = 'output window, operand 0']
    %15 = vsyncpa [#allocation4], 0
    %s16 = scalar_lea.sflag [#allocation4], 1
    %17 = vsyncpa %s16, 0
    %18 = vsyncpa [#allocation7], 0
    %s19 = scalar_lea.sflag [#allocation7], 1
    %20 = vsyncpa %s19, 0
    %21 = vsyncpa [#allocation10], 0
    %22 = vsyncpa [#allocation13], 0
    %23 = vsyncpa [#allocation5], 0
    %s24 = scalar_lea.sflag [#allocation5], 1
    %25 = vsyncpa %s24, 0
    loop: start=0, step=1, limit=4
    $region2: #{tpu_custom_call.1} parent=1 // loop_pre_header
      _
    $region3: #{tpu_custom_call.1} parent=1 // loop_header
      %s27 = sphi 0, %s31
      %p28 = scmp.ge.s32.totalorder %s27, 4
      %s34 = sphi 0, %s46
      %s35 = sphi 0, %s42
      %s36 = sphi 0, %s34
      %s37 = sphi 0, %s35
      %s38 = sphi 0, %s36
      %s39 = sphi 0, %s37
      %s51 = sphi 0, %s53
      %s54 = sphi 0, %s51
      %s55 = sphi 0, %s54
      %s71 = sphi 0, %s55
      %s77 = sphi 0, %s79
      %s80 = sphi 0, %s77
      %s81 = sphi 0, %s80
      %s97 = sphi 0, %s81
      %s103 = sphi 0, %s105
      %s106 = sphi 0, %s103
      %s107 = sphi 0, %s106
      %s123 = sphi 0, %s107
      %s129 = sphi 0, %s131
      %s132 = sphi 0, %s129
      %s133 = sphi 0, %s132
      %s149 = sphi 0, %s133
      %s153 = sphi 0, %s153
      %s155 = sphi 0, %s153
      %s156 = sphi 0, %s155
      %s170 = sphi 0, %s156
      %s174 = sphi 0, %s174
      %s176 = sphi 0, %s174
      %s177 = sphi 0, %s176
      %s191 = sphi 0, %s177
      %s195 = sphi 0, %s195
      %s197 = sphi 0, %s195
      %s198 = sphi 0, %s197
      %s212 = sphi 0, %s198
      %s216 = sphi 0, %s216
      %s218 = sphi 0, %s216
      %s219 = sphi 0, %s218
      %s233 = sphi 0, %s219
      %s237 = sphi 0, %s237
      %s239 = sphi 0, %s237
      %s240 = sphi 0, %s239
      %s254 = sphi 0, %s240
      %s258 = sphi 0, %s258
      %s260 = sphi 0, %s258
      %s261 = sphi 0, %s260
      %s275 = sphi 0, %s261
      %s283 = sphi 0, %s285
      %s286 = sphi 0, %s283
      %s287 = sphi 0, %s286
      %s303 = sphi 0, %s287
    $region4: #{tpu_custom_call.1} parent=1 // loop_header_branch
      %30 = sbr.rel (%p28) target = $region8
    $region5: #{tpu_custom_call.1} parent=1 // loop_body
      %s32 = ssub.s32 %s27, 1
      %s33 = ssub.s32 %s27, 2
      %s40 = sadd.s32 1, %s35
      %p41 = scmp.ge.s32.totalorder %s40, 1
      %s42 = scalar_select %p41, 0, %s40
      %s43 = sadd.s32 1, %s34
      %s44 = scalar_select %p41, %s43, %s34
      %p45 = scmp.ge.s32.totalorder %s44, 2
      %s46 = scalar_select %p45, 0, %s44
      %s47 = ssub.s32 %s34, %s46
      %s48 = ssub.s32 %s35, %s42
      %s49 = sor.u32 %s47, %s48
      %p50 = scmp.eq.s32.totalorder %s49, 0
      %s52 = sadd.s32 %s51, 1
      %s53 = scalar_select %p50, %s51, %s52
      %p56 = pneg %p50
      %p57 = scmp.eq.s32.totalorder %s27, 1
      %p58 = por %p56, %p57
      %p59 = scmp.ne.s32.totalorder %s51, %s54
      %p60 = scmp.eq.s32.totalorder %s27, 0
      %p61 = por %p59, %p60
      %p62 = scmp.ne.s32.totalorder %s51, %s54
      %p63 = scmp.eq.s32.totalorder %s32, 1
      %p64 = por %p62, %p63
      %p65 = scmp.ne.s32.totalorder %s54, %s55
      %p66 = scmp.eq.s32.totalorder %s32, 0
      %p67 = por %p65, %p66
      %p68 = scmp.ne.s32.totalorder %s54, %s55
      %p69 = scmp.eq.s32.totalorder %s33, 1
      %p70 = por %p68, %p69
      %p72 = scmp.ne.s32.totalorder %s55, %s71
      %p73 = scmp.eq.s32.totalorder %s33, 0
      %p74 = por %p72, %p73
      %s75 = ssub.s32 %s34, %s46
      %p76 = scmp.eq.s32.totalorder %s75, 0
      %s78 = sadd.s32 %s77, 1
      %s79 = scalar_select %p76, %s77, %s78
      %p82 = pneg %p76
      %p83 = scmp.eq.s32.totalorder %s27, 1
      %p84 = por %p82, %p83
      %p85 = scmp.ne.s32.totalorder %s77, %s80
      %p86 = scmp.eq.s32.totalorder %s27, 0
      %p87 = por %p85, %p86
      %p88 = scmp.ne.s32.totalorder %s77, %s80
      %p89 = scmp.eq.s32.totalorder %s32, 1
      %p90 = por %p88, %p89
      %p91 = scmp.ne.s32.totalorder %s80, %s81
      %p92 = scmp.eq.s32.totalorder %s32, 0
      %p93 = por %p91, %p92
      %p94 = scmp.ne.s32.totalorder %s80, %s81
      %p95 = scmp.eq.s32.totalorder %s33, 1
      %p96 = por %p94, %p95
      %p98 = scmp.ne.s32.totalorder %s81, %s97
      %p99 = scmp.eq.s32.totalorder %s33, 0
      %p100 = por %p98, %p99
      %s101 = ssub.s32 %s34, %s46
      %p102 = scmp.eq.s32.totalorder %s101, 0
      %s104 = sadd.s32 %s103, 1
      %s105 = scalar_select %p102, %s103, %s104
      %p108 = pneg %p102
      %p109 = scmp.eq.s32.totalorder %s27, 1
      %p110 = por %p108, %p109
      %p111 = scmp.ne.s32.totalorder %s103, %s106
      %p112 = scmp.eq.s32.totalorder %s27, 0
      %p113 = por %p111, %p112
      %p114 = scmp.ne.s32.totalorder %s103, %s106
      %p115 = scmp.eq.s32.totalorder %s32, 1
      %p116 = por %p114, %p115
      %p117 = scmp.ne.s32.totalorder %s106, %s107
      %p118 = scmp.eq.s32.totalorder %s32, 0
      %p119 = por %p117, %p118
      %p120 = scmp.ne.s32.totalorder %s106, %s107
      %p121 = scmp.eq.s32.totalorder %s33, 1
      %p122 = por %p120, %p121
      %p124 = scmp.ne.s32.totalorder %s107, %s123
      %p125 = scmp.eq.s32.totalorder %s33, 0
      %p126 = por %p124, %p125
      %s127 = ssub.s32 %s34, %s46
      %p128 = scmp.eq.s32.totalorder %s127, 0
      %s130 = sadd.s32 %s129, 1
      %s131 = scalar_select %p128, %s129, %s130
      %p134 = pneg %p128
      %p135 = scmp.eq.s32.totalorder %s27, 1
      %p136 = por %p134, %p135
      %p137 = scmp.ne.s32.totalorder %s129, %s132
      %p138 = scmp.eq.s32.totalorder %s27, 0
      %p139 = por %p137, %p138
      %p140 = scmp.ne.s32.totalorder %s129, %s132
      %p141 = scmp.eq.s32.totalorder %s32, 1
      %p142 = por %p140, %p141
      %p143 = scmp.ne.s32.totalorder %s132, %s133
      %p144 = scmp.eq.s32.totalorder %s32, 0
      %p145 = por %p143, %p144
      %p146 = scmp.ne.s32.totalorder %s132, %s133
      %p147 = scmp.eq.s32.totalorder %s33, 1
      %p148 = por %p146, %p147
      %p150 = scmp.ne.s32.totalorder %s133, %s149
      %p151 = scmp.eq.s32.totalorder %s33, 0
      %p152 = por %p150, %p151
      %s154 = sadd.s32 %s153, 1
      %p157 = scmp.eq.s32.totalorder %s27, 1
      %p158 = scmp.ne.s32.totalorder %s153, %s155
      %p159 = scmp.eq.s32.totalorder %s27, 0
      %p160 = por %p158, %p159
      %p161 = scmp.ne.s32.totalorder %s153, %s155
      %p162 = scmp.eq.s32.totalorder %s32, 1
      %p163 = por %p161, %p162
      %p164 = scmp.ne.s32.totalorder %s155, %s156
      %p165 = scmp.eq.s32.totalorder %s32, 0
      %p166 = por %p164, %p165
      %p167 = scmp.ne.s32.totalorder %s155, %s156
      %p168 = scmp.eq.s32.totalorder %s33, 1
      %p169 = por %p167, %p168
      %p171 = scmp.ne.s32.totalorder %s156, %s170
      %p172 = scmp.eq.s32.totalorder %s33, 0
      %p173 = por %p171, %p172
      %s175 = sadd.s32 %s174, 1
      %p178 = scmp.eq.s32.totalorder %s27, 1
      %p179 = scmp.ne.s32.totalorder %s174, %s176
      %p180 = scmp.eq.s32.totalorder %s27, 0
      %p181 = por %p179, %p180
      %p182 = scmp.ne.s32.totalorder %s174, %s176
      %p183 = scmp.eq.s32.totalorder %s32, 1
      %p184 = por %p182, %p183
      %p185 = scmp.ne.s32.totalorder %s176, %s177
      %p186 = scmp.eq.s32.totalorder %s32, 0
      %p187 = por %p185, %p186
      %p188 = scmp.ne.s32.totalorder %s176, %s177
      %p189 = scmp.eq.s32.totalorder %s33, 1
      %p190 = por %p188, %p189
      %p192 = scmp.ne.s32.totalorder %s177, %s191
      %p193 = scmp.eq.s32.totalorder %s33, 0
      %p194 = por %p192, %p193
      %s196 = sadd.s32 %s195, 1
      %p199 = scmp.eq.s32.totalorder %s27, 1
      %p200 = scmp.ne.s32.totalorder %s195, %s197
      %p201 = scmp.eq.s32.totalorder %s27, 0
      %p202 = por %p200, %p201
      %p203 = scmp.ne.s32.totalorder %s195, %s197
      %p204 = scmp.eq.s32.totalorder %s32, 1
      %p205 = por %p203, %p204
      %p206 = scmp.ne.s32.totalorder %s197, %s198
      %p207 = scmp.eq.s32.totalorder %s32, 0
      %p208 = por %p206, %p207
      %p209 = scmp.ne.s32.totalorder %s197, %s198
      %p210 = scmp.eq.s32.totalorder %s33, 1
      %p211 = por %p209, %p210
      %p213 = scmp.ne.s32.totalorder %s198, %s212
      %p214 = scmp.eq.s32.totalorder %s33, 0
      %p215 = por %p213, %p214
      %s217 = sadd.s32 %s216, 1
      %p220 = scmp.eq.s32.totalorder %s27, 1
      %p221 = scmp.ne.s32.totalorder %s216, %s218
      %p222 = scmp.eq.s32.totalorder %s27, 0
      %p223 = por %p221, %p222
      %p224 = scmp.ne.s32.totalorder %s216, %s218
      %p225 = scmp.eq.s32.totalorder %s32, 1
      %p226 = por %p224, %p225
      %p227 = scmp.ne.s32.totalorder %s218, %s219
      %p228 = scmp.eq.s32.totalorder %s32, 0
      %p229 = por %p227, %p228
      %p230 = scmp.ne.s32.totalorder %s218, %s219
      %p231 = scmp.eq.s32.totalorder %s33, 1
      %p232 = por %p230, %p231
      %p234 = scmp.ne.s32.totalorder %s219, %s233
      %p235 = scmp.eq.s32.totalorder %s33, 0
      %p236 = por %p234, %p235
      %s238 = sadd.s32 %s237, 1
      %p241 = scmp.eq.s32.totalorder %s27, 1
      %p242 = scmp.ne.s32.totalorder %s237, %s239
      %p243 = scmp.eq.s32.totalorder %s27, 0
      %p244 = por %p242, %p243
      %p245 = scmp.ne.s32.totalorder %s237, %s239
      %p246 = scmp.eq.s32.totalorder %s32, 1
      %p247 = por %p245, %p246
      %p248 = scmp.ne.s32.totalorder %s239, %s240
      %p249 = scmp.eq.s32.totalorder %s32, 0
      %p250 = por %p248, %p249
      %p251 = scmp.ne.s32.totalorder %s239, %s240
      %p252 = scmp.eq.s32.totalorder %s33, 1
      %p253 = por %p251, %p252
      %p255 = scmp.ne.s32.totalorder %s240, %s254
      %p256 = scmp.eq.s32.totalorder %s33, 0
      %p257 = por %p255, %p256
      %s259 = sadd.s32 %s258, 1
      %p262 = scmp.eq.s32.totalorder %s27, 1
      %p263 = scmp.ne.s32.totalorder %s258, %s260
      %p264 = scmp.eq.s32.totalorder %s27, 0
      %p265 = por %p263, %p264
      %p266 = scmp.ne.s32.totalorder %s258, %s260
      %p267 = scmp.eq.s32.totalorder %s32, 1
      %p268 = por %p266, %p267
      %p269 = scmp.ne.s32.totalorder %s260, %s261
      %p270 = scmp.eq.s32.totalorder %s32, 0
      %p271 = por %p269, %p270
      %p272 = scmp.ne.s32.totalorder %s260, %s261
      %p273 = scmp.eq.s32.totalorder %s33, 1
      %p274 = por %p272, %p273
      %p276 = scmp.ne.s32.totalorder %s261, %s275
      %p277 = scmp.eq.s32.totalorder %s33, 0
      %p278 = por %p276, %p277
      %s279 = ssub.s32 %s34, %s46
      %s280 = ssub.s32 %s35, %s42
      %s281 = sor.u32 %s279, %s280
      %p282 = scmp.eq.s32.totalorder %s281, 0
      %s284 = sadd.s32 %s283, 1
      %s285 = scalar_select %p282, %s283, %s284
      %p288 = pneg %p282
      %p289 = scmp.eq.s32.totalorder %s27, 1
      %p290 = por %p288, %p289
      %p291 = scmp.ne.s32.totalorder %s283, %s286
      %p292 = scmp.eq.s32.totalorder %s27, 0
      %p293 = por %p291, %p292
      %p294 = scmp.ne.s32.totalorder %s283, %s286
      %p295 = scmp.eq.s32.totalorder %s32, 1
      %p296 = por %p294, %p295
      %p297 = scmp.ne.s32.totalorder %s286, %s287
      %p298 = scmp.eq.s32.totalorder %s32, 0
      %p299 = por %p297, %p298
      %p300 = scmp.ne.s32.totalorder %s286, %s287
      %p301 = scmp.eq.s32.totalorder %s33, 1
      %p302 = por %p300, %p301
      %p304 = scmp.ne.s32.totalorder %s287, %s303
      %p305 = scmp.eq.s32.totalorder %s33, 0
      %p306 = por %p304, %p305
      %p307 = scmp.le.s32.totalorder 1, %s27
      %p308 = scmp.lt.s32.totalorder %s27, 3
      %p309 = pnand %p307, %p308
      %p310 = pneg %p309
      // Predicated region
      $region9: #{tpu_custom_call.1} parent=5 // pred_check
        _
      $region10: #{tpu_custom_call.1} parent=5 // pred_check_branch
        %312 = sbr.rel (%p309) target = $region12
      $region11: #{tpu_custom_call.1} parent=5 // pred_region
        %s313 = ssub.s32 %s27, 1
        // Predicated region
        $region13: #{tpu_custom_call.1} parent=11 // pred_check
          %p314 = pneg %p166
        $region14: #{tpu_custom_call.1} parent=11 // pred_check_branch
          %316 = sbr.rel (%p314) target = $region16
        $region15: #{tpu_custom_call.1} parent=11 // pred_region
          %318 = vsyncadd [#allocation10], 0
          %s319 = sshll.u32 %s4, 4
          %s320 = int_to_ptr.hbm [resolvable:$true] %s319
          %s321 = sshll.u32 [#allocation9], 4
          %s322 = int_to_ptr.vmem [resolvable:$true] %s321
          %327 = dma.hbm_to_vmem [thread:$0]  %s320, 256, %s322, [#allocation10], 64, 64, 4
        $region16: #{tpu_custom_call.1} parent=11 // pred_fallthru
          _
        // Predicated region
        $region17: #{tpu_custom_call.1} parent=11 // pred_check
          %p328 = pneg %p187
        $region18: #{tpu_custom_call.1} parent=11 // pred_check_branch
          %330 = sbr.rel (%p328) target = $region20
        $region19: #{tpu_custom_call.1} parent=11 // pred_region
          %332 = vsyncadd [#allocation10], 0
          %s333 = sshll.u32 %s5, 4
          %s334 = int_to_ptr.hbm [resolvable:$true] %s333
          %s335 = sshll.u32 [#allocation11], 4
          %s336 = int_to_ptr.vmem [resolvable:$true] %s335
          %341 = dma.hbm_to_vmem [thread:$0]  %s334, 256, %s336, [#allocation10], 64, 64, 4
        $region20: #{tpu_custom_call.1} parent=11 // pred_fallthru
          _
        // Predicated region
        $region21: #{tpu_custom_call.1} parent=11 // pred_check
          %p342 = pneg %p208
        $region22: #{tpu_custom_call.1} parent=11 // pred_check_branch
          %344 = sbr.rel (%p342) target = $region24
        $region23: #{tpu_custom_call.1} parent=11 // pred_region
          %346 = vsyncadd [#allocation13], 0
          %s347 = sshll.u32 %s6, 4
          %s348 = int_to_ptr.hbm [resolvable:$true] %s347
          %s349 = sshll.u32 [#allocation12], 4
          %s350 = int_to_ptr.vmem [resolvable:$true] %s349
          %355 = dma.hbm_to_vmem [thread:$0]  %s348, 256, %s350, [#allocation13], 64, 64, 4
        $region24: #{tpu_custom_call.1} parent=11 // pred_fallthru
          _
        // Predicated region
        $region25: #{tpu_custom_call.1} parent=11 // pred_check
          %p356 = pneg %p229
        $region26: #{tpu_custom_call.1} parent=11 // pred_check_branch
          %358 = sbr.rel (%p356) target = $region28
        $region27: #{tpu_custom_call.1} parent=11 // pred_region
          %360 = vsyncadd [#allocation13], 0
          %s361 = sshll.u32 %s7, 4
          %s362 = int_to_ptr.hbm [resolvable:$true] %s361
          %s363 = sshll.u32 [#allocation14], 4
          %s364 = int_to_ptr.vmem [resolvable:$true] %s363
          %369 = dma.hbm_to_vmem [thread:$0]  %s362, 256, %s364, [#allocation13], 64, 64, 4
        $region28: #{tpu_custom_call.1} parent=11 // pred_fallthru
          _
        // Predicated region
        $region29: #{tpu_custom_call.1} parent=11 // pred_check
          %p370 = pneg %p250
        $region30: #{tpu_custom_call.1} parent=11 // pred_check_branch
          %372 = sbr.rel (%p370) target = $region32
        $region31: #{tpu_custom_call.1} parent=11 // pred_region
          _
        $region32: #{tpu_custom_call.1} parent=11 // pred_fallthru
          _
        // Predicated region
        $region33: #{tpu_custom_call.1} parent=11 // pred_check
          %p373 = pneg %p271
        $region34: #{tpu_custom_call.1} parent=11 // pred_check_branch
          %375 = sbr.rel (%p373) target = $region36
        $region35: #{tpu_custom_call.1} parent=11 // pred_region
          _
        $region36: #{tpu_custom_call.1} parent=11 // pred_fallthru
          _
      $region12: #{tpu_custom_call.1} parent=5 // pred_fallthru
        _
      %p376 = scmp.lt.s32.totalorder %s27, 2
      // Predicated region
      $region37: #{tpu_custom_call.1} parent=5 // pred_check
        %p377 = pneg %p376
      $region38: #{tpu_custom_call.1} parent=5 // pred_check_branch
        %379 = sbr.rel (%p377) target = $region40
      $region39: #{tpu_custom_call.1} parent=5 // pred_region
        // Predicated region
        $region41: #{tpu_custom_call.1} parent=39 // pred_check
          %p380 = pneg %p61
        $region42: #{tpu_custom_call.1} parent=39 // pred_check_branch
          %382 = sbr.rel (%p380) target = $region44
        $region43: #{tpu_custom_call.1} parent=39 // pred_region
          %s383 = sand.u32 %s51, 1
          %s384 = scalar_lea.sflag [#allocation4], %s383
          %s385 = sand.u32 %s51, 1
          %s386 = smul.addr %s385, 8
          %s387 = scalar_lea.vmem [#allocation3], %s386
          %389 = vsyncadd %s384, 0
          %s390 = sadd.s32 %s35, %s34
          %s391 = smul.addr %s390, 8
          %s392 = scalar_lea.hbm %s0, %s391
          %s394 = sshll.u32 %s392, 4
          %s395 = int_to_ptr.hbm [resolvable:$true] %s394
          %s396 = sshll.u32 %s387, 4
          %s397 = int_to_ptr.vmem [resolvable:$true] %s396
          %399 = dma.hbm_to_vmem [thread:$0]  %s395, 128, %s397, %s384
        $region44: #{tpu_custom_call.1} parent=39 // pred_fallthru
          _
        // Predicated region
        $region45: #{tpu_custom_call.1} parent=39 // pred_check
          %p400 = pneg %p87
        $region46: #{tpu_custom_call.1} parent=39 // pred_check_branch
          %402 = sbr.rel (%p400) target = $region48
        $region47: #{tpu_custom_call.1} parent=39 // pred_region
          %s403 = sand.u32 %s27, 1
          %s404 = scalar_lea.sflag [#allocation7], %s403
          %s405 = sand.u32 %s77, 1
          %s406 = smul.addr %s405, 8
          %s407 = scalar_lea.vmem [#allocation6], %s406
          %409 = vsyncadd %s404, 0
          %s410 = smul.addr %s34, 8
          %s411 = scalar_lea.hbm %s1, %s410
          %s413 = sshll.u32 %s411, 4
          %s414 = int_to_ptr.hbm [resolvable:$true] %s413
          %s415 = sshll.u32 %s407, 4
          %s416 = int_to_ptr.vmem [resolvable:$true] %s415
          %418 = dma.hbm_to_vmem [thread:$0]  %s414, 128, %s416, %s404
        $region48: #{tpu_custom_call.1} parent=39 // pred_fallthru
          _
        // Predicated region
        $region49: #{tpu_custom_call.1} parent=39 // pred_check
          %p419 = pneg %p113
        $region50: #{tpu_custom_call.1} parent=39 // pred_check_branch
          %421 = sbr.rel (%p419) target = $region52
        $region51: #{tpu_custom_call.1} parent=39 // pred_region
          %s422 = sand.u32 %s27, 1
          %s423 = scalar_lea.sflag [#allocation7], %s422
          %s424 = sand.u32 %s103, 1
          %s425 = smul.addr %s424, 8
          %s426 = scalar_lea.vmem [#allocation8], %s425
          %428 = vsyncadd %s423, 0
          %s429 = smul.addr %s34, 8
          %s430 = scalar_lea.hbm %s2, %s429
          %s432 = sshll.u32 %s430, 4
          %s433 = int_to_ptr.hbm [resolvable:$true] %s432
          %s434 = sshll.u32 %s426, 4
          %s435 = int_to_ptr.vmem [resolvable:$true] %s434
          %437 = dma.hbm_to_vmem [thread:$0]  %s433, 128, %s435, %s423
        $region52: #{tpu_custom_call.1} parent=39 // pred_fallthru
          _
        // Predicated region
        $region53: #{tpu_custom_call.1} parent=39 // pred_check
          %p438 = pneg %p139
        $region54: #{tpu_custom_call.1} parent=39 // pred_check_branch
          %440 = sbr.rel (%p438) target = $region56
        $region55: #{tpu_custom_call.1} parent=39 // pred_region
          %p441 = scmp.lt.s32.totalorder %s34, 1
          %s442 = scalar_select %p441, %s34, 1
          %s443 = scalar_lea.vmem %s3, %s442
        $region56: #{tpu_custom_call.1} parent=39 // pred_fallthru
          _
      $region40: #{tpu_custom_call.1} parent=5 // pred_fallthru
        _
      %p444 = scmp.le.s32.totalorder 1, %s27
      %p445 = scmp.lt.s32.totalorder %s27, 3
      %p446 = pnand %p444, %p445
      %p447 = pneg %p446
      // Predicated region
      $region57: #{tpu_custom_call.1} parent=5 // pred_check
        _
      $region58: #{tpu_custom_call.1} parent=5 // pred_check_branch
        %449 = sbr.rel (%p446) target = $region60
      $region59: #{tpu_custom_call.1} parent=5 // pred_region
        %s450 = ssub.s32 %s27, 1
        %s451 = sand.u32 %s54, 1
        %s452 = scalar_lea.sflag [#allocation4], %s451
        %s453 = sand.u32 %s54, 1
        %s454 = smul.addr %s453, 8
        %s455 = scalar_lea.vmem [#allocation3], %s454
        // Predicated region
        $region61: #{tpu_custom_call.1} parent=59 // pred_check
          %p456 = pneg %p67
        $region62: #{tpu_custom_call.1} parent=59 // pred_check_branch
          %458 = sbr.rel (%p456) target = $region64
        $region63: #{tpu_custom_call.1} parent=59 // pred_region
          %460 = dma.done %s452, 128
        $region64: #{tpu_custom_call.1} parent=59 // pred_fallthru
          _
        %s461 = sand.u32 %s32, 1
        %s462 = scalar_lea.sflag [#allocation7], %s461
        %s463 = sand.u32 %s80, 1
        %s464 = smul.addr %s463, 8
        %s465 = scalar_lea.vmem [#allocation6], %s464
        // Predicated region
        $region65: #{tpu_custom_call.1} parent=59 // pred_check
          %p466 = pneg %p93
        $region66: #{tpu_custom_call.1} parent=59 // pred_check_branch
          %468 = sbr.rel (%p466) target = $region68
        $region67: #{tpu_custom_call.1} parent=59 // pred_region
          %470 = dma.done %s462, 128
        $region68: #{tpu_custom_call.1} parent=59 // pred_fallthru
          _
        %s471 = sand.u32 %s32, 1
        %s472 = scalar_lea.sflag [#allocation7], %s471
        %s473 = sand.u32 %s106, 1
        %s474 = smul.addr %s473, 8
        %s475 = scalar_lea.vmem [#allocation8], %s474
        // Predicated region
        $region69: #{tpu_custom_call.1} parent=59 // pred_check
          %p476 = pneg %p119
        $region70: #{tpu_custom_call.1} parent=59 // pred_check_branch
          %478 = sbr.rel (%p476) target = $region72
        $region71: #{tpu_custom_call.1} parent=59 // pred_region
          %480 = dma.done %s472, 128
        $region72: #{tpu_custom_call.1} parent=59 // pred_fallthru
          _
        // Predicated region
        $region73: #{tpu_custom_call.1} parent=59 // pred_check
          %p481 = pneg %p166
        $region74: #{tpu_custom_call.1} parent=59 // pred_check_branch
          %483 = sbr.rel (%p481) target = $region76
        $region75: #{tpu_custom_call.1} parent=59 // pred_region
          %485 = dma.done [#allocation10], 256
        $region76: #{tpu_custom_call.1} parent=59 // pred_fallthru
          _
        // Predicated region
        $region77: #{tpu_custom_call.1} parent=59 // pred_check
          %p486 = pneg %p187
        $region78: #{tpu_custom_call.1} parent=59 // pred_check_branch
          %488 = sbr.rel (%p486) target = $region80
        $region79: #{tpu_custom_call.1} parent=59 // pred_region
          %490 = dma.done [#allocation10], 256
        $region80: #{tpu_custom_call.1} parent=59 // pred_fallthru
          _
        // Predicated region
        $region81: #{tpu_custom_call.1} parent=59 // pred_check
          %p491 = pneg %p208
        $region82: #{tpu_custom_call.1} parent=59 // pred_check_branch
          %493 = sbr.rel (%p491) target = $region84
        $region83: #{tpu_custom_call.1} parent=59 // pred_region
          %495 = dma.done [#allocation13], 256
        $region84: #{tpu_custom_call.1} parent=59 // pred_fallthru
          _
        // Predicated region
        $region85: #{tpu_custom_call.1} parent=59 // pred_check
          %p496 = pneg %p229
        $region86: #{tpu_custom_call.1} parent=59 // pred_check_branch
          %498 = sbr.rel (%p496) target = $region88
        $region87: #{tpu_custom_call.1} parent=59 // pred_region
          %500 = dma.done [#allocation13], 256
        $region88: #{tpu_custom_call.1} parent=59 // pred_fallthru
          _
        %s501 = sand.u32 %s54, 1
        %s502 = scalar_lea.sflag [#allocation4], %s501
        %s503 = sand.u32 %s54, 1
        %s504 = smul.addr %s503, 8
        %s505 = scalar_lea.vmem [#allocation3], %s504
        %p506 = pneg %p67
        %p507 = pneg %p64
        %s508 = sand.u32 %s32, 1
        %s509 = scalar_lea.sflag [#allocation7], %s508
        %s510 = sand.u32 %s80, 1
        %s511 = smul.addr %s510, 8
        %s512 = scalar_lea.vmem [#allocation6], %s511
        %p513 = pneg %p93
        %p514 = pneg %p90
        %s515 = sand.u32 %s32, 1
        %s516 = scalar_lea.sflag [#allocation7], %s515
        %s517 = sand.u32 %s106, 1
        %s518 = smul.addr %s517, 8
        %s519 = scalar_lea.vmem [#allocation8], %s518
        %p520 = pneg %p119
        %p521 = pneg %p116
        %p522 = scmp.lt.s32.totalorder %s36, 1
        %s523 = scalar_select %p522, %s36, 1
        %s524 = scalar_lea.vmem %s3, %s523
        %p525 = pneg %p145
        %p526 = pneg %p142
        %p527 = pneg %p166
        %p528 = pneg %p163
        %p529 = pneg %p187
        %p530 = pneg %p184
        %p531 = pneg %p208
        %p532 = pneg %p205
        %p533 = pneg %p229
        %p534 = pneg %p226
        %p535 = pneg %p250
        %p536 = pneg %p247
        %p537 = pneg %p271
        %p538 = pneg %p268
        %p539 = pneg %p299
        %p540 = pneg %p296
        %s541 = sand.u32 %s286, 1
        %s542 = scalar_lea.sflag [#allocation5], %s541
        %s543 = sand.u32 %s286, 1
        %s544 = smul.addr %s543, 8
        %s545 = scalar_lea.vmem [#allocation15], %s544
        %p546 = scmp.lt.s32.totalorder %s36, 1
        %s547 = scalar_select %p546, %s36, 1
        %s548 = scalar_lea.vmem %s3, %s547
        %v550 = vld [vmem:[%s455] sm:$0xff]
        %v551 = vld [vmem:[%s465] sm:$0xff]
        %v552 = vld [vmem:[%s475] sm:$0xff]
        %v553 = vld [vmem:[%s548] sm:$0x1]
        %v554 = vunpack.c.0.s8 %v553
        %v555 = vcvt.s32.f32 %v554
        %v556 = vmul.f32 %v555, -1e+09
        %v557 = vperm.slane %v556, 0
        %v558 = vpack.c.bf16 %v550, %v550
        %v559 = vld [vmem:[#allocation9] sm:$0xf]
        %v560 = vld [vmem:[#allocation9 + $0x4] sm:$0xf]
        %v561 = vld [vmem:[#allocation9 + $0x8] sm:$0xf]
        %v562 = vld [vmem:[#allocation9 + $0xc] sm:$0xf]
        %v567 = vunpack.c.l.b16 %v559
        %v568 = vunpack.c.l.b16 %v560
        %v569 = vunpack.c.l.b16 %v561
        %v570 = vunpack.c.l.b16 %v562
        %v571 = vpack.c.b16 %v568, %v567
        %v572 = vpack.c.b16 %v570, %v569
        %vm575 = vcmask 261120
        %v577 = vsel %vm575, %v558, 0
        %579 = vmatpush.bf16.msra.mxu0 0
        %580 = vmatpush.bf16.msra.mxu0 0
        %581 = vmatpush.bf16.msra.mxu0 0
        %582 = vmatpush.bf16.msra.mxu0 0
        %583 = vmatpush.bf16.msra.mxu0 0
        %584 = vmatpush.bf16.msra.mxu0 0
        %585 = vmatpush.bf16.msra.mxu0 %v572
        %586 = vmatpush.bf16.msra.mxu0 %v571
        %587 = vmatmul.bf16.gmra.mxu0 %v577
        %v588 = vpop.f32.mrf.mxu0
        %v589 = vadd.f32 0.0, %v588
        %v590 = vpop.f32.mrf.mxu0
        %591 = vdwg.mxu0
        %v592 = vpack.c.bf16 %v551, %v551
        %v593 = vld [vmem:[#allocation11] sm:$0xf]
        %v594 = vld [vmem:[#allocation11 + $0x4] sm:$0xf]
        %v595 = vld [vmem:[#allocation11 + $0x8] sm:$0xf]
        %v596 = vld [vmem:[#allocation11 + $0xc] sm:$0xf]
        %v601 = vunpack.c.l.b16 %v593
        %v602 = vunpack.c.l.b16 %v594
        %v603 = vunpack.c.l.b16 %v595
        %v604 = vunpack.c.l.b16 %v596
        %v605 = vpack.c.b16 %v602, %v601
        %v606 = vpack.c.b16 %v604, %v603
        %v610 = vsel %vm575, %v592, 0
        %612 = vmatpush.bf16.msra.mxu0 0
        %613 = vmatpush.bf16.msra.mxu0 0
        %614 = vmatpush.bf16.msra.mxu0 0
        %615 = vmatpush.bf16.msra.mxu0 0
        %616 = vmatpush.bf16.msra.mxu0 0
        %617 = vmatpush.bf16.msra.mxu0 0
        %618 = vmatpush.bf16.msra.mxu0 %v606
        %619 = vmatpush.bf16.msra.mxu0 %v605
        %620 = vmatmul.bf16.gmra.mxu0 %v610
        %v621 = vpop.f32.mrf.mxu0
        %v622 = vadd.f32 0.0, %v621
        %v623 = vpop.f32.mrf.mxu0
        %624 = vdwg.mxu0
        %v625 = vpack.c.bf16 %v552, %v552
        %v626 = vld [vmem:[#allocation12] sm:$0xf]
        %v627 = vld [vmem:[#allocation12 + $0x4] sm:$0xf]
        %v628 = vld [vmem:[#allocation12 + $0x8] sm:$0xf]
        %v629 = vld [vmem:[#allocation12 + $0xc] sm:$0xf]
        %v634 = vunpack.c.l.b16 %v626
        %v635 = vunpack.c.l.b16 %v627
        %v636 = vunpack.c.l.b16 %v628
        %v637 = vunpack.c.l.b16 %v629
        %v638 = vpack.c.b16 %v635, %v634
        %v639 = vpack.c.b16 %v637, %v636
        %v643 = vsel %vm575, %v625, 0
        %645 = vmatpush.bf16.msra.mxu0 0
        %646 = vmatpush.bf16.msra.mxu0 0
        %647 = vmatpush.bf16.msra.mxu0 0
        %648 = vmatpush.bf16.msra.mxu0 0
        %649 = vmatpush.bf16.msra.mxu0 0
        %650 = vmatpush.bf16.msra.mxu0 0
        %651 = vmatpush.bf16.msra.mxu0 %v639
        %652 = vmatpush.bf16.msra.mxu0 %v638
        %653 = vmatmul.bf16.gmra.mxu0 %v643
        %v654 = vpop.f32.mrf.mxu0
        %v655 = vadd.f32 0.0, %v654
        %v656 = vpop.f32.mrf.mxu0
        %657 = vdwg.mxu0
        %v658 = vpack.c.bf16 %v589, %v589
        %v659 = vpack.c.bf16 %v622, %v622
        %v660 = vpack.c.bf16 %v655, %v655
        %vm661 = vcmask 64512
        %v663 = vsel %vm661, %v658, 0
        %v666 = vsel %vm661, %v659, 0
        %668 = vmatpush.bf16.xpose.msra.mxu0 0
        %669 = vmatpush.bf16.xpose.msra.mxu0 0
        %670 = vmatpush.bf16.xpose.msra.mxu0 0
        %671 = vmatpush.bf16.xpose.msra.mxu0 0
        %672 = vmatpush.bf16.xpose.msra.mxu0 0
        %673 = vmatpush.bf16.xpose.msra.mxu0 0
        %674 = vmatpush.bf16.xpose.msra.mxu0 0
        %675 = vmatpush.bf16.xpose.msra.mxu0 %v666
        %676 = vmatmul.bf16.gmra.mxu0 %v663
        %v677 = vpop.f32.mrf.mxu0
        %v678 = vadd.f32 %v557, %v677
        %v679 = vpop.f32.mrf.mxu0
        %680 = vdwg.mxu0
        %v681 = vsel %vm661, %v678, -inf
        %682 = vmax.xlane.f32.xlu0 %v681
        %v683 = vpop.xlane.xlu0 %682
        %v684 = vsub.f32 %v678, %v683
        %v685 = vmul.f32 %v684, 1.442695
        %v686 = vpow.pop %v685
        %v687 = vsel %vm661, %v686, 0.0
        %688 = vadd.xlane.f32.xlu0 %v687
        %v689 = vpop.xlane.xlu0 %688
        %v690 = vrcp.pop %v689
        %v691 = vmul.f32 %v686, %v690
        %v692 = vpack.c.bf16 %v691, %v691
        %v694 = vsel %vm661, %v692, 0
        %vm696 = vcmask 1043456
        %v698 = vsel %vm696, %v660, 0
        %700 = vmatpush.bf16.msra.mxu0 0
        %701 = vmatpush.bf16.msra.mxu0 0
        %702 = vmatpush.bf16.msra.mxu0 0
        %703 = vmatpush.bf16.msra.mxu0 0
        %704 = vmatpush.bf16.msra.mxu0 0
        %705 = vmatpush.bf16.msra.mxu0 0
        %706 = vmatpush.bf16.msra.mxu0 0
        %707 = vmatpush.bf16.msra.mxu0 %v698
        %708 = vmatmul.bf16.gmra.mxu0 %v694
        %v709 = vpop.f32.mrf.mxu0
        %v710 = vadd.f32 0.0, %v709
        %v711 = vpop.f32.mrf.mxu0
        %712 = vdwg.mxu0
        %713 = vst.msk [vmem:[#allocation2] sm:$0xff] %vm661, %v710
        %v715 = vunpack.c.l.b16 %v658
        %v716 = vpack.c.b16 %v715, %v715
        %717 = vrot.lane.b32.xlu0 %v716, 120
        %v718 = vpop.permute.xlu0 %717
        %v720 = vunpack.c.l.b16 %v659
        %v721 = vpack.c.b16 %v720, %v720
        %722 = vrot.lane.b32.xlu0 %v721, 120
        %v723 = vpop.permute.xlu0 %722
        %v725 = vsel %vm661, %v718, 0
        %v728 = vsel %vm661, %v723, 0
        %730 = vmatpush.bf16.xpose.msra.mxu0 0
        %731 = vmatpush.bf16.xpose.msra.mxu0 0
        %732 = vmatpush.bf16.xpose.msra.mxu0 0
        %733 = vmatpush.bf16.xpose.msra.mxu0 0
        %734 = vmatpush.bf16.xpose.msra.mxu0 0
        %735 = vmatpush.bf16.xpose.msra.mxu0 0
        %736 = vmatpush.bf16.xpose.msra.mxu0 0
        %737 = vmatpush.bf16.xpose.msra.mxu0 %v728
        %738 = vmatmul.bf16.gmra.mxu0 %v725
        %v739 = vpop.f32.mrf.mxu0
        %v740 = vadd.f32 %v557, %v739
        %v741 = vpop.f32.mrf.mxu0
        %742 = vdwg.mxu0
        %v743 = vsel %vm661, %v740, -inf
        %744 = vmax.xlane.f32.xlu0 %v743
        %v745 = vpop.xlane.xlu0 %744
        %v746 = vsub.f32 %v740, %v745
        %v747 = vmul.f32 %v746, 1.442695
        %v748 = vpow.pop %v747
        %v749 = vsel %vm661, %v748, 0.0
        %750 = vadd.xlane.f32.xlu0 %v749
        %v751 = vpop.xlane.xlu0 %750
        %v752 = vrcp.pop %v751
        %v753 = vmul.f32 %v748, %v752
        %v754 = vpack.c.bf16 %v753, %v753
        %v756 = vunpack.c.l.b16 %v660
        %v757 = vpack.c.b16 %v756, %v756
        %758 = vrot.lane.b32.xlu0 %v757, 120
        %v759 = vpop.permute.xlu0 %758
        %v761 = vsel %vm661, %v754, 0
        %v764 = vsel %vm696, %v759, 0
        %766 = vmatpush.bf16.msra.mxu0 0
        %767 = vmatpush.bf16.msra.mxu0 0
        %768 = vmatpush.bf16.msra.mxu0 0
        %769 = vmatpush.bf16.msra.mxu0 0
        %770 = vmatpush.bf16.msra.mxu0 0
        %771 = vmatpush.bf16.msra.mxu0 0
        %772 = vmatpush.bf16.msra.mxu0 0
        %773 = vmatpush.bf16.msra.mxu0 %v764
        %774 = vmatmul.bf16.gmra.mxu0 %v761
        %v775 = vpop.f32.mrf.mxu0
        %v776 = vadd.f32 0.0, %v775
        %v777 = vpop.f32.mrf.mxu0
        %778 = vdwg.mxu0
        %780 = vrot.lane.b32.xlu0 %v776, 8
        %v781 = vpop.permute.xlu0 %780
        %vm783 = vcmask 130112
        %784 = vst.msk [vmem:[#allocation2] sm:$0xff] %vm783, %v781
        %785 = vrot.lane.b32.xlu0 %v716, 112
        %v786 = vpop.permute.xlu0 %785
        %787 = vrot.lane.b32.xlu0 %v721, 112
        %v788 = vpop.permute.xlu0 %787
        %v790 = vsel %vm661, %v786, 0
        %v793 = vsel %vm661, %v788, 0
        %795 = vmatpush.bf16.xpose.msra.mxu0 0
        %796 = vmatpush.bf16.xpose.msra.mxu0 0
        %797 = vmatpush.bf16.xpose.msra.mxu0 0
        %798 = vmatpush.bf16.xpose.msra.mxu0 0
        %799 = vmatpush.bf16.xpose.msra.mxu0 0
        %800 = vmatpush.bf16.xpose.msra.mxu0 0
        %801 = vmatpush.bf16.xpose.msra.mxu0 0
        %802 = vmatpush.bf16.xpose.msra.mxu0 %v793
        %803 = vmatmul.bf16.gmra.mxu0 %v790
        %v804 = vpop.f32.mrf.mxu0
        %v805 = vadd.f32 %v557, %v804
        %v806 = vpop.f32.mrf.mxu0
        %807 = vdwg.mxu0
        %v808 = vsel %vm661, %v805, -inf
        %809 = vmax.xlane.f32.xlu0 %v808
        %v810 = vpop.xlane.xlu0 %809
        %v811 = vsub.f32 %v805, %v810
        %v812 = vmul.f32 %v811, 1.442695
        %v813 = vpow.pop %v812
        %v814 = vsel %vm661, %v813, 0.0
        %815 = vadd.xlane.f32.xlu0 %v814
        %v816 = vpop.xlane.xlu0 %815
        %v817 = vrcp.pop %v816
        %v818 = vmul.f32 %v813, %v817
        %v819 = vpack.c.bf16 %v818, %v818
        %820 = vrot.lane.b32.xlu0 %v757, 112
        %v821 = vpop.permute.xlu0 %820
        %v823 = vsel %vm661, %v819, 0
        %v826 = vsel %vm696, %v821, 0
        %828 = vmatpush.bf16.msra.mxu0 0
        %829 = vmatpush.bf16.msra.mxu0 0
        %830 = vmatpush.bf16.msra.mxu0 0
        %831 = vmatpush.bf16.msra.mxu0 0
        %832 = vmatpush.bf16.msra.mxu0 0
        %833 = vmatpush.bf16.msra.mxu0 0
        %834 = vmatpush.bf16.msra.mxu0 0
        %835 = vmatpush.bf16.msra.mxu0 %v826
        %836 = vmatmul.bf16.gmra.mxu0 %v823
        %v837 = vpop.f32.mrf.mxu0
        %v838 = vadd.f32 0.0, %v837
        %v839 = vpop.f32.mrf.mxu0
        %840 = vdwg.mxu0
        %842 = vrot.lane.b32.xlu0 %v838, 16
        %v843 = vpop.permute.xlu0 %842
        %vm845 = vcmask 195712
        %846 = vst.msk [vmem:[#allocation2] sm:$0xff] %vm845, %v843
        %847 = vrot.lane.b32.xlu0 %v716, 104
        %v848 = vpop.permute.xlu0 %847
        %849 = vrot.lane.b32.xlu0 %v721, 104
        %v850 = vpop.permute.xlu0 %849
        %v852 = vsel %vm661, %v848, 0
        %v855 = vsel %vm661, %v850, 0
        %857 = vmatpush.bf16.xpose.msra.mxu0 0
        %858 = vmatpush.bf16.xpose.msra.mxu0 0
        %859 = vmatpush.bf16.xpose.msra.mxu0 0
        %860 = vmatpush.bf16.xpose.msra.mxu0 0
        %861 = vmatpush.bf16.xpose.msra.mxu0 0
        %862 = vmatpush.bf16.xpose.msra.mxu0 0
        %863 = vmatpush.bf16.xpose.msra.mxu0 0
        %864 = vmatpush.bf16.xpose.msra.mxu0 %v855
        %865 = vmatmul.bf16.gmra.mxu0 %v852
        %v866 = vpop.f32.mrf.mxu0
        %v867 = vadd.f32 %v557, %v866
        %v868 = vpop.f32.mrf.mxu0
        %869 = vdwg.mxu0
        %v870 = vsel %vm661, %v867, -inf
        %871 = vmax.xlane.f32.xlu0 %v870
        %v872 = vpop.xlane.xlu0 %871
        %v873 = vsub.f32 %v867, %v872
        %v874 = vmul.f32 %v873, 1.442695
        %v875 = vpow.pop %v874
        %v876 = vsel %vm661, %v875, 0.0
        %877 = vadd.xlane.f32.xlu0 %v876
        %v878 = vpop.xlane.xlu0 %877
        %v879 = vrcp.pop %v878
        %v880 = vmul.f32 %v875, %v879
        %v881 = vpack.c.bf16 %v880, %v880
        %882 = vrot.lane.b32.xlu0 %v757, 104
        %v883 = vpop.permute.xlu0 %882
        %v885 = vsel %vm661, %v881, 0
        %v888 = vsel %vm696, %v883, 0
        %890 = vmatpush.bf16.msra.mxu0 0
        %891 = vmatpush.bf16.msra.mxu0 0
        %892 = vmatpush.bf16.msra.mxu0 0
        %893 = vmatpush.bf16.msra.mxu0 0
        %894 = vmatpush.bf16.msra.mxu0 0
        %895 = vmatpush.bf16.msra.mxu0 0
        %896 = vmatpush.bf16.msra.mxu0 0
        %897 = vmatpush.bf16.msra.mxu0 %v888
        %898 = vmatmul.bf16.gmra.mxu0 %v885
        %v899 = vpop.f32.mrf.mxu0
        %v900 = vadd.f32 0.0, %v899
        %v901 = vpop.f32.mrf.mxu0
        %902 = vdwg.mxu0
        %904 = vrot.lane.b32.xlu0 %v900, 24
        %v905 = vpop.permute.xlu0 %904
        %vm907 = vcmask 261312
        %908 = vst.msk [vmem:[#allocation2] sm:$0xff] %vm907, %v905
        %v909 = vld [vmem:[#allocation2] sm:$0xff]
        %v910 = vpack.c.bf16 %v909, %v909
        %v911 = vld [vmem:[#allocation14] sm:$0xf]
        %v912 = vld [vmem:[#allocation14 + $0x4] sm:$0xf]
        %v913 = vld [vmem:[#allocation14 + $0x8] sm:$0xf]
        %v914 = vld [vmem:[#allocation14 + $0xc] sm:$0xf]
        %v919 = vunpack.c.l.b16 %v911
        %v920 = vunpack.c.l.b16 %v912
        %v921 = vunpack.c.l.b16 %v913
        %v922 = vunpack.c.l.b16 %v914
        %v923 = vpack.c.b16 %v920, %v919
        %v924 = vpack.c.b16 %v922, %v921
        %v928 = vsel %vm575, %v910, 0
        %930 = vmatpush.bf16.msra.mxu0 0
        %931 = vmatpush.bf16.msra.mxu0 0
        %932 = vmatpush.bf16.msra.mxu0 0
        %933 = vmatpush.bf16.msra.mxu0 0
        %934 = vmatpush.bf16.msra.mxu0 0
        %935 = vmatpush.bf16.msra.mxu0 0
        %936 = vmatpush.bf16.msra.mxu0 %v924
        %937 = vmatpush.bf16.msra.mxu0 %v923
        %938 = vmatmul.bf16.gmra.mxu0 %v928
        %v939 = vpop.f32.mrf.mxu0
        %v940 = vadd.f32 %v550, %v939
        %v941 = vpop.f32.mrf.mxu0
        %942 = vdwg.mxu0
        %v943 = vsel %vm575, %v940, 0.0
        %944 = vadd.xlane.f32.xlu0 %v943
        %v945 = vpop.xlane.xlu0 %944
        %v946 = vrcp.pop 32.0
        %v947 = vmul.f32 32.0, %v946
        %v948 = vsub.f32 1.0, %v947
        %v949 = vmul.f32 %v946, %v948
        %v950 = vadd.f32 %v946, %v949
        %vm951 = vweird.f32 %v946
        %v952 = vsel %vm951, %v946, %v950
        %v953 = vmul.f32 %v945, %v952
        %v954 = vsub.f32 %v940, %v953
        %v955 = vmul.f32 %v954, %v954
        %v956 = vsel %vm575, %v955, 0.0
        %957 = vadd.xlane.f32.xlu0 %v956
        %v958 = vpop.xlane.xlu0 %957
        %v959 = vmul.f32 %v958, %v952
        %v960 = vadd.f32 %v959, 1e-05
        %v961 = vrsqrt.pop %v960
        %v962 = vmul.f32 %v961, %v960
        %v963 = vmul.f32 %v962, %v961
        %v964 = vmul.f32 0.5, %v963
        %v965 = vsub.f32 1.5, %v964
        %v966 = vmul.f32 %v961, %v965
        %vm967 = vweird.f32 %v960
        %vm968 = vweird.f32 %v961
        %vm969 = vmor %vm967, %vm968
        %v970 = vsel %vm969, %v961, %v966
        %v971 = vmul.f32 %v954, %v970
        %v972 = vld [vmem:[%s8] sm:$0x1]
        %v974 = vperm.slane %v972, 0
        %v976 = vmul.f32 %v971, %v974
        %v977 = vld [vmem:[%s9] sm:$0x1]
        %v979 = vperm.slane %v977, 0
        %v981 = vadd.f32 %v976, %v979
        %982 = vst.msk [vmem:[%s545] sm:$0xff] %vm575, %v981
        %s983 = sand.u32 %s286, 1
        %s984 = scalar_lea.sflag [#allocation5], %s983
        %s985 = sand.u32 %s286, 1
        %s986 = smul.addr %s985, 8
        %s987 = scalar_lea.vmem [#allocation15], %s986
        // Predicated region
        $region89: #{tpu_custom_call.1} parent=59 // pred_check
          %p988 = pneg %p296
        $region90: #{tpu_custom_call.1} parent=59 // pred_check_branch
          %990 = sbr.rel (%p988) target = $region92
        $region91: #{tpu_custom_call.1} parent=59 // pred_region
          %992 = vsyncadd %s984, 0
          %s993 = sadd.s32 %s37, %s36
          %s994 = smul.addr %s993, 8
          %s995 = scalar_lea.hbm %s10, %s994
          %s997 = sshll.u32 %s987, 4
          %s998 = int_to_ptr.vmem [resolvable:$true] %s997
          %s999 = sshll.u32 %s995, 4
          %s1000 = int_to_ptr.hbm [resolvable:$true] %s999
          %1002 = dma.vmem_to_hbm [thread:$0]  %s998, 128, %s1000, %s984
        $region92: #{tpu_custom_call.1} parent=59 // pred_fallthru
          _
      $region60: #{tpu_custom_call.1} parent=5 // pred_fallthru
        _
      %p1003 = scmp.le.s32.totalorder 2, %s27
      // Predicated region
      $region93: #{tpu_custom_call.1} parent=5 // pred_check
        %p1004 = pneg %p1003
      $region94: #{tpu_custom_call.1} parent=5 // pred_check_branch
        %1006 = sbr.rel (%p1004) target = $region96
      $region95: #{tpu_custom_call.1} parent=5 // pred_region
        %s1007 = ssub.s32 %s27, 2
        // Predicated region
        $region97: #{tpu_custom_call.1} parent=95 // pred_check
          %p1008 = pneg %p302
        $region98: #{tpu_custom_call.1} parent=95 // pred_check_branch
          %1010 = sbr.rel (%p1008) target = $region100
        $region99: #{tpu_custom_call.1} parent=95 // pred_region
          %s1011 = sand.u32 %s287, 1
          %s1012 = scalar_lea.sflag [#allocation5], %s1011
          %s1013 = sand.u32 %s287, 1
          %s1014 = smul.addr %s1013, 8
          %s1015 = scalar_lea.vmem [#allocation15], %s1014
          %1017 = dma.done %s1012, 128
        $region100: #{tpu_custom_call.1} parent=95 // pred_fallthru
          _
      $region96: #{tpu_custom_call.1} parent=5 // pred_fallthru
        _
    $region6: #{tpu_custom_call.1} parent=1 // loop_footer
      %s31 = sadd.s32 1, %s27
    $region7: #{tpu_custom_call.1} parent=1 // loop_footer_branch
      %26 = sbr.rel target = $region3
    $region8: #{tpu_custom_call.1} parent=1 // loop_exit
      _
    %1018 = vsyncpa [#allocation4], 1
    %s1019 = scalar_lea.sflag [#allocation4], 1
    %1020 = vsyncpa %s1019, 1
    %1021 = vsyncpa [#allocation7], 1
    %s1022 = scalar_lea.sflag [#allocation7], 1
    %1023 = vsyncpa %s1022, 1
    %1024 = vsyncpa [#allocation10], 1
    %1025 = vsyncpa [#allocation13], 1
    %1026 = vsyncpa [#allocation5], 1
    %s1027 = scalar_lea.sflag [#allocation5], 1
    %1028 = vsyncpa %s1027, 1

// kernel: tpu_custom_call.1
$region0: #{tpu_custom_call.1}
  #allocation0 [shape = 'u32[]', space=smem, size = 0x4, offset = 0x4, fixed_abs, tag = 'smem constant byte address 0x4 - core index']
  #allocation1 [shape = 'u32[72,128]{1,0:T(1,128)}', space=vmem, size = 0x9000, scoped, tag = 'internal scratch']
  #allocation2 [shape = 'f32[8,32]{1,0:T(8,128)}', space=vmem, size = 0x1000, scoped, tag = 'scratch operand']
  %s0 = inlined_call_operand.hbm [shape: f32[2,8,32], index: 0, kind: input, shape index: {}]
  %s1 = inlined_call_operand.hbm [shape: f32[2,8,32], index: 1, kind: input, shape index: {}]
  %s2 = inlined_call_operand.hbm [shape: f32[2,8,32], index: 2, kind: input, shape index: {}]
  %s3 = inlined_call_operand.vmem [shape: s8[2,1,1,8], index: 3, kind: input, shape index: {}]
  %s4 = inlined_call_operand.hbm [shape: bf16[32,32], index: 4, kind: input, shape index: {}]
  %s5 = inlined_call_operand.hbm [shape: bf16[32,32], index: 5, kind: input, shape index: {}]
  %s6 = inlined_call_operand.hbm [shape: bf16[32,32], index: 6, kind: input, shape index: {}]
  %s7 = inlined_call_operand.hbm [shape: bf16[32,32], index: 7, kind: input, shape index: {}]
  %s8 = inlined_call_operand.vmem [shape: f32[1,32], index: 8, kind: input, shape index: {}]
  %s9 = inlined_call_operand.vmem [shape: f32[1,32], index: 9, kind: input, shape index: {}]
  %s10 = inlined_call_operand.hbm [shape: f32[2,8,32], index: 10, kind: output, shape index: {}]
  %s11 = sld [smem:[#allocation0]]
  $region101: #{tpu_custom_call.1} parent=0
    _
  %s13 = ssub.s32 1, %s11
  %s14 = scalar_select 0, %s13, %s11
  $region1: #{tpu_custom_call.1} parent=0
    #allocation3 [shape = 'u8[8192]{0}', space=vmem, size = 0x2000, scoped, tag = 'input window, operand 0']
    #allocation4 [shape = 's32[2]{0}', space=sflag, size = 0x8, scoped, tag = 'scoped memory for tpu_custom_call.1']
    #allocation5 [shape = 's32[2]{0}', space=sflag, size = 0x8, scoped, tag = 'scoped memory for tpu_custom_call.1']
    #allocation6 [shape = 'u8[8192]{0}', space=vmem, size = 0x2000, scoped, tag = 'input window, operand 1']
    #allocation7 [shape = 's32[2]{0}', space=sflag, size = 0x8, scoped, tag = 'scoped memory for tpu_custom_call.1']
    #allocation8 [shape = 'u8[8192]{0}', space=vmem, size = 0x2000, scoped, tag = 'input window, operand 2']
    #allocation9 [shape = 'u8[8192]{0}', space=vmem, size = 0x2000, scoped, tag = 'input window, operand 4, single buffered']
    #allocation10 [shape = 's32[1]{0}', space=sflag, size = 0x4, scoped, tag = 'scoped memory for tpu_custom_call.1']
    #allocation11 [shape = 'u8[8192]{0}', space=vmem, size = 0x2000, scoped, tag = 'input window, operand 5, single buffered']
    #allocation12 [shape = 'u8[8192]{0}', space=vmem, size = 0x2000, scoped, tag = 'input window, operand 6, single buffered']
    #allocation13 [shape = 's32[1]{0}', space=sflag, size = 0x4, scoped, tag = 'scoped memory for tpu_custom_call.1']
    #allocation14 [shape = 'u8[8192]{0}', space=vmem, size = 0x2000, scoped, tag = 'input window, operand 7, single buffered']
    #allocation15 [shape = 'u8[8192]{0}', space=vmem, size = 0x2000, scoped, tag = 'output window, operand 0']
    %15 = vsyncpa [#allocation4], 0
    %s16 = scalar_lea.sflag [#allocation4], 1
    %17 = vsyncpa %s16, 0
    %18 = vsyncpa [#allocation7], 0
    %s19 = scalar_lea.sflag [#allocation7], 1
    %20 = vsyncpa %s19, 0
    %21 = vsyncpa [#allocation10], 0
    %22 = vsyncpa [#allocation13], 0
    %23 = vsyncpa [#allocation5], 0
    %s24 = scalar_lea.sflag [#allocation5], 1
    %25 = vsyncpa %s24, 0
    loop: start=0, step=1, limit=4
    $region2: #{tpu_custom_call.1} parent=1 // loop_pre_header
      _
    $region3: #{tpu_custom_call.1} parent=1 // loop_header
      %s27 = sphi 0, %s31
      %p28 = scmp.ge.s32.totalorder %s27, 4
      %s34 = sphi 0, %s46
      %s35 = sphi 0, %s42
      %s36 = sphi 0, %s34
      %s37 = sphi 0, %s35
      %s38 = sphi 0, %s36
      %s39 = sphi 0, %s37
      %s51 = sphi 0, %s53
      %s54 = sphi 0, %s51
      %s55 = sphi 0, %s54
      %s71 = sphi 0, %s55
      %s77 = sphi 0, %s79
      %s80 = sphi 0, %s77
      %s81 = sphi 0, %s80
      %s97 = sphi 0, %s81
      %s103 = sphi 0, %s105
      %s106 = sphi 0, %s103
      %s107 = sphi 0, %s106
      %s123 = sphi 0, %s107
      %s129 = sphi 0, %s131
      %s132 = sphi 0, %s129
      %s133 = sphi 0, %s132
      %s149 = sphi 0, %s133
      %s153 = sphi 0, %s153
      %s155 = sphi 0, %s153
      %s156 = sphi 0, %s155
      %s170 = sphi 0, %s156
      %s174 = sphi 0, %s174
      %s176 = sphi 0, %s174
      %s177 = sphi 0, %s176
      %s191 = sphi 0, %s177
      %s195 = sphi 0, %s195
      %s197 = sphi 0, %s195
      %s198 = sphi 0, %s197
      %s212 = sphi 0, %s198
      %s216 = sphi 0, %s216
      %s218 = sphi 0, %s216
      %s219 = sphi 0, %s218
      %s233 = sphi 0, %s219
      %s237 = sphi 0, %s237
      %s239 = sphi 0, %s237
      %s240 = sphi 0, %s239
      %s254 = sphi 0, %s240
      %s258 = sphi 0, %s258
      %s260 = sphi 0, %s258
      %s261 = sphi 0, %s260
      %s275 = sphi 0, %s261
      %s283 = sphi 0, %s285
      %s286 = sphi 0, %s283
      %s287 = sphi 0, %s286
      %s303 = sphi 0, %s287
    $region4: #{tpu_custom_call.1} parent=1 // loop_header_branch
      %30 = sbr.rel (%p28) target = $region8
    $region5: #{tpu_custom_call.1} parent=1 // loop_body
      %s32 = ssub.s32 %s27, 1
      %s33 = ssub.s32 %s27, 2
      %s40 = sadd.s32 1, %s35
      %p41 = scmp.ge.s32.totalorder %s40, 1
      %s42 = scalar_select %p41, 0, %s40
      %s43 = sadd.s32 1, %s34
      %s44 = scalar_select %p41, %s43, %s34
      %p45 = scmp.ge.s32.totalorder %s44, 2
      %s46 = scalar_select %p45, 0, %s44
      %s47 = ssub.s32 %s34, %s46
      %s48 = ssub.s32 %s35, %s42
      %s49 = sor.u32 %s47, %s48
      %p50 = scmp.eq.s32.totalorder %s49, 0
      %s52 = sadd.s32 %s51, 1
      %s53 = scalar_select %p50, %s51, %s52
      %p56 = pneg %p50
      %p57 = scmp.eq.s32.totalorder %s27, 1
      %p58 = por %p56, %p57
      %p59 = scmp.ne.s32.totalorder %s51, %s54
      %p60 = scmp.eq.s32.totalorder %s27, 0
      %p61 = por %p59, %p60
      %p62 = scmp.ne.s32.totalorder %s51, %s54
      %p63 = scmp.eq.s32.totalorder %s32, 1
      %p64 = por %p62, %p63
      %p65 = scmp.ne.s32.totalorder %s54, %s55
      %p66 = scmp.eq.s32.totalorder %s32, 0
      %p67 = por %p65, %p66
      %p68 = scmp.ne.s32.totalorder %s54, %s55
      %p69 = scmp.eq.s32.totalorder %s33, 1
      %p70 = por %p68, %p69
      %p72 = scmp.ne.s32.totalorder %s55, %s71
      %p73 = scmp.eq.s32.totalorder %s33, 0
      %p74 = por %p72, %p73
      %s75 = ssub.s32 %s34, %s46
      %p76 = scmp.eq.s32.totalorder %s75, 0
      %s78 = sadd.s32 %s77, 1
      %s79 = scalar_select %p76, %s77, %s78
      %p82 = pneg %p76
      %p83 = scmp.eq.s32.totalorder %s27, 1
      %p84 = por %p82, %p83
      %p85 = scmp.ne.s32.totalorder %s77, %s80
      %p86 = scmp.eq.s32.totalorder %s27, 0
      %p87 = por %p85, %p86
      %p88 = scmp.ne.s32.totalorder %s77, %s80
      %p89 = scmp.eq.s32.totalorder %s32, 1
      %p90 = por %p88, %p89
      %p91 = scmp.ne.s32.totalorder %s80, %s81
      %p92 = scmp.eq.s32.totalorder %s32, 0
      %p93 = por %p91, %p92
      %p94 = scmp.ne.s32.totalorder %s80, %s81
      %p95 = scmp.eq.s32.totalorder %s33, 1
      %p96 = por %p94, %p95
      %p98 = scmp.ne.s32.totalorder %s81, %s97
      %p99 = scmp.eq.s32.totalorder %s33, 0
      %p100 = por %p98, %p99
      %s101 = ssub.s32 %s34, %s46
      %p102 = scmp.eq.s32.totalorder %s101, 0
      %s104 = sadd.s32 %s103, 1
      %s105 = scalar_select %p102, %s103, %s104
      %p108 = pneg %p102
      %p109 = scmp.eq.s32.totalorder %s27, 1
      %p110 = por %p108, %p109
      %p111 = scmp.ne.s32.totalorder %s103, %s106
      %p112 = scmp.eq.s32.totalorder %s27, 0
      %p113 = por %p111, %p112
      %p114 = scmp.ne.s32.totalorder %s103, %s106
      %p115 = scmp.eq.s32.totalorder %s32, 1
      %p116 = por %p114, %p115
      %p117 = scmp.ne.s32.totalorder %s106, %s107
      %p118 = scmp.eq.s32.totalorder %s32, 0
      %p119 = por %p117, %p118
      %p120 = scmp.ne.s32.totalorder %s106, %s107
      %p121 = scmp.eq.s32.totalorder %s33, 1
      %p122 = por %p120, %p121
      %p124 = scmp.ne.s32.totalorder %s107, %s123
      %p125 = scmp.eq.s32.totalorder %s33, 0
      %p126 = por %p124, %p125
      %s127 = ssub.s32 %s34, %s46
      %p128 = scmp.eq.s32.totalorder %s127, 0
      %s130 = sadd.s32 %s129, 1
      %s131 = scalar_select %p128, %s129, %s130
      %p134 = pneg %p128
      %p135 = scmp.eq.s32.totalorder %s27, 1
      %p136 = por %p134, %p135
      %p137 = scmp.ne.s32.totalorder %s129, %s132
      %p138 = scmp.eq.s32.totalorder %s27, 0
      %p139 = por %p137, %p138
      %p140 = scmp.ne.s32.totalorder %s129, %s132
      %p141 = scmp.eq.s32.totalorder %s32, 1
      %p142 = por %p140, %p141
      %p143 = scmp.ne.s32.totalorder %s132, %s133
      %p144 = scmp.eq.s32.totalorder %s32, 0
      %p145 = por %p143, %p144
      %p146 = scmp.ne.s32.totalorder %s132, %s133
      %p147 = scmp.eq.s32.totalorder %s33, 1
      %p148 = por %p146, %p147
      %p150 = scmp.ne.s32.totalorder %s133, %s149
      %p151 = scmp.eq.s32.totalorder %s33, 0
      %p152 = por %p150, %p151
      %s154 = sadd.s32 %s153, 1
      %p157 = scmp.eq.s32.totalorder %s27, 1
      %p158 = scmp.ne.s32.totalorder %s153, %s155
      %p159 = scmp.eq.s32.totalorder %s27, 0
      %p160 = por %p158, %p159
      %p161 = scmp.ne.s32.totalorder %s153, %s155
      %p162 = scmp.eq.s32.totalorder %s32, 1
      %p163 = por %p161, %p162
      %p164 = scmp.ne.s32.totalorder %s155, %s156
      %p165 = scmp.eq.s32.totalorder %s32, 0
      %p166 = por %p164, %p165
      %p167 = scmp.ne.s32.totalorder %s155, %s156
      %p168 = scmp.eq.s32.totalorder %s33, 1
      %p169 = por %p167, %p168
      %p171 = scmp.ne.s32.totalorder %s156, %s170
      %p172 = scmp.eq.s32.totalorder %s33, 0
      %p173 = por %p171, %p172
      %s175 = sadd.s32 %s174, 1
      %p178 = scmp.eq.s32.totalorder %s27, 1
      %p179 = scmp.ne.s32.totalorder %s174, %s176
      %p180 = scmp.eq.s32.totalorder %s27, 0
      %p181 = por %p179, %p180
      %p182 = scmp.ne.s32.totalorder %s174, %s176
      %p183 = scmp.eq.s32.totalorder %s32, 1
      %p184 = por %p182, %p183
      %p185 = scmp.ne.s32.totalorder %s176, %s177
      %p186 = scmp.eq.s32.totalorder %s32, 0
      %p187 = por %p185, %p186
      %p188 = scmp.ne.s32.totalorder %s176, %s177
      %p189 = scmp.eq.s32.totalorder %s33, 1
      %p190 = por %p188, %p189
      %p192 = scmp.ne.s32.totalorder %s177, %s191
      %p193 = scmp.eq.s32.totalorder %s33, 0
      %p194 = por %p192, %p193
      %s196 = sadd.s32 %s195, 1
      %p199 = scmp.eq.s32.totalorder %s27, 1
      %p200 = scmp.ne.s32.totalorder %s195, %s197
      %p201 = scmp.eq.s32.totalorder %s27, 0
      %p202 = por %p200, %p201
      %p203 = scmp.ne.s32.totalorder %s195, %s197
      %p204 = scmp.eq.s32.totalorder %s32, 1
      %p205 = por %p203, %p204
      %p206 = scmp.ne.s32.totalorder %s197, %s198
      %p207 = scmp.eq.s32.totalorder %s32, 0
      %p208 = por %p206, %p207
      %p209 = scmp.ne.s32.totalorder %s197, %s198
      %p210 = scmp.eq.s32.totalorder %s33, 1
      %p211 = por %p209, %p210
      %p213 = scmp.ne.s32.totalorder %s198, %s212
      %p214 = scmp.eq.s32.totalorder %s33, 0
      %p215 = por %p213, %p214
      %s217 = sadd.s32 %s216, 1
      %p220 = scmp.eq.s32.totalorder %s27, 1
      %p221 = scmp.ne.s32.totalorder %s216, %s218
      %p222 = scmp.eq.s32.totalorder %s27, 0
      %p223 = por %p221, %p222
      %p224 = scmp.ne.s32.totalorder %s216, %s218
      %p225 = scmp.eq.s32.totalorder %s32, 1
      %p226 = por %p224, %p225
      %p227 = scmp.ne.s32.totalorder %s218, %s219
      %p228 = scmp.eq.s32.totalorder %s32, 0
      %p229 = por %p227, %p228
      %p230 = scmp.ne.s32.totalorder %s218, %s219
      %p231 = scmp.eq.s32.totalorder %s33, 1
      %p232 = por %p230, %p231
      %p234 = scmp.ne.s32.totalorder %s219, %s233
      %p235 = scmp.eq.s32.totalorder %s33, 0
      %p236 = por %p234, %p235
      %s238 = sadd.s32 %s237, 1
      %p241 = scmp.eq.s32.totalorder %s27, 1
      %p242 = scmp.ne.s32.totalorder %s237, %s239
      %p243 = scmp.eq.s32.totalorder %s27, 0
      %p244 = por %p242, %p243
      %p245 = scmp.ne.s32.totalorder %s237, %s239
      %p246 = scmp.eq.s32.totalorder %s32, 1
      %p247 = por %p245, %p246
      %p248 = scmp.ne.s32.totalorder %s239, %s240
      %p249 = scmp.eq.s32.totalorder %s32, 0
      %p250 = por %p248, %p249
      %p251 = scmp.ne.s32.totalorder %s239, %s240
      %p252 = scmp.eq.s32.totalorder %s33, 1
      %p253 = por %p251, %p252
      %p255 = scmp.ne.s32.totalorder %s240, %s254
      %p256 = scmp.eq.s32.totalorder %s33, 0
      %p257 = por %p255, %p256
      %s259 = sadd.s32 %s258, 1
      %p262 = scmp.eq.s32.totalorder %s27, 1
      %p263 = scmp.ne.s32.totalorder %s258, %s260
      %p264 = scmp.eq.s32.totalorder %s27, 0
      %p265 = por %p263, %p264
      %p266 = scmp.ne.s32.totalorder %s258, %s260
      %p267 = scmp.eq.s32.totalorder %s32, 1
      %p268 = por %p266, %p267
      %p269 = scmp.ne.s32.totalorder %s260, %s261
      %p270 = scmp.eq.s32.totalorder %s32, 0
      %p271 = por %p269, %p270
      %p272 = scmp.ne.s32.totalorder %s260, %s261
      %p273 = scmp.eq.s32.totalorder %s33, 1
      %p274 = por %p272, %p273
      %p276 = scmp.ne.s32.totalorder %s261, %s275
      %p277 = scmp.eq.s32.totalorder %s33, 0
      %p278 = por %p276, %p277
      %s279 = ssub.s32 %s34, %s46
      %s280 = ssub.s32 %s35, %s42
      %s281 = sor.u32 %s279, %s280
      %p282 = scmp.eq.s32.totalorder %s281, 0
      %s284 = sadd.s32 %s283, 1
      %s285 = scalar_select %p282, %s283, %s284
      %p288 = pneg %p282
      %p289 = scmp.eq.s32.totalorder %s27, 1
      %p290 = por %p288, %p289
      %p291 = scmp.ne.s32.totalorder %s283, %s286
      %p292 = scmp.eq.s32.totalorder %s27, 0
      %p293 = por %p291, %p292
      %p294 = scmp.ne.s32.totalorder %s283, %s286
      %p295 = scmp.eq.s32.totalorder %s32, 1
      %p296 = por %p294, %p295
      %p297 = scmp.ne.s32.totalorder %s286, %s287
      %p298 = scmp.eq.s32.totalorder %s32, 0
      %p299 = por %p297, %p298
      %p300 = scmp.ne.s32.totalorder %s286, %s287
      %p301 = scmp.eq.s32.totalorder %s33, 1
      %p302 = por %p300, %p301
      %p304 = scmp.ne.s32.totalorder %s287, %s303
      %p305 = scmp.eq.s32.totalorder %s33, 0
      %p306 = por %p304, %p305
      %p307 = scmp.le.s32.totalorder 1, %s27
      %p308 = scmp.lt.s32.totalorder %s27, 3
      %p309 = pnand %p307, %p308
      %p310 = pneg %p309
      // Predicated region
      $region9: #{tpu_custom_call.1} parent=5 // pred_check
        _
      $region10: #{tpu_custom_call.1} parent=5 // pred_check_branch
        %312 = sbr.rel (%p309) target = $region12
      $region11: #{tpu_custom_call.1} parent=5 // pred_region
        %s313 = ssub.s32 %s27, 1
        // Predicated region
        $region13: #{tpu_custom_call.1} parent=11 // pred_check
          %p314 = pneg %p166
        $region14: #{tpu_custom_call.1} parent=11 // pred_check_branch
          %316 = sbr.rel (%p314) target = $region16
        $region15: #{tpu_custom_call.1} parent=11 // pred_region
          %318 = vsyncadd [#allocation10], 0
          %s319 = sshll.u32 %s4, 4
          %s320 = int_to_ptr.hbm [resolvable:$true] %s319
          %s321 = sshll.u32 [#allocation9], 4
          %s322 = int_to_ptr.vmem [resolvable:$true] %s321
          %327 = dma.hbm_to_vmem [thread:$0]  %s320, 256, %s322, [#allocation10], 64, 64, 4
        $region16: #{tpu_custom_call.1} parent=11 // pred_fallthru
          _
        // Predicated region
        $region17: #{tpu_custom_call.1} parent=11 // pred_check
          %p328 = pneg %p187
        $region18: #{tpu_custom_call.1} parent=11 // pred_check_branch
          %330 = sbr.rel (%p328) target = $region20
        $region19: #{tpu_custom_call.1} parent=11 // pred_region
          %332 = vsyncadd [#allocation10], 0
          %s333 = sshll.u32 %s5, 4
          %s334 = int_to_ptr.hbm [resolvable:$true] %s333
          %s335 = sshll.u32 [#allocation11], 4
          %s336 = int_to_ptr.vmem [resolvable:$true] %s335
          %341 = dma.hbm_to_vmem [thread:$0]  %s334, 256, %s336, [#allocation10], 64, 64, 4
        $region20: #{tpu_custom_call.1} parent=11 // pred_fallthru
          _
        // Predicated region
        $region21: #{tpu_custom_call.1} parent=11 // pred_check
          %p342 = pneg %p208
        $region22: #{tpu_custom_call.1} parent=11 // pred_check_branch
          %344 = sbr.rel (%p342) target = $region24
        $region23: #{tpu_custom_call.1} parent=11 // pred_region
          %346 = vsyncadd [#allocation13], 0
          %s347 = sshll.u32 %s6, 4
          %s348 = int_to_ptr.hbm [resolvable:$true] %s347
          %s349 = sshll.u32 [#allocation12], 4
          %s350 = int_to_ptr.vmem [resolvable:$true] %s349
          %355 = dma.hbm_to_vmem [thread:$0]  %s348, 256, %s350, [#allocation13], 64, 64, 4
        $region24: #{tpu_custom_call.1} parent=11 // pred_fallthru
          _
        // Predicated region
        $region25: #{tpu_custom_call.1} parent=11 // pred_check
          %p356 = pneg %p229
        $region26: #{tpu_custom_call.1} parent=11 // pred_check_branch
          %358 = sbr.rel (%p356) target = $region28
        $region27: #{tpu_custom_call.1} parent=11 // pred_region
          %360 = vsyncadd [#allocation13], 0
          %s361 = sshll.u32 %s7, 4
          %s362 = int_to_ptr.hbm [resolvable:$true] %s361
          %s363 = sshll.u32 [#allocation14], 4
          %s364 = int_to_ptr.vmem [resolvable:$true] %s363
          %369 = dma.hbm_to_vmem [thread:$0]  %s362, 256, %s364, [#allocation13], 64, 64, 4
        $region28: #{tpu_custom_call.1} parent=11 // pred_fallthru
          _
        // Predicated region
        $region29: #{tpu_custom_call.1} parent=11 // pred_check
          %p370 = pneg %p250
        $region30: #{tpu_custom_call.1} parent=11 // pred_check_branch
          %372 = sbr.rel (%p370) target = $region32
        $region31: #{tpu_custom_call.1} parent=11 // pred_region
          _
        $region32: #{tpu_custom_call.1} parent=11 // pred_fallthru
          _
        // Predicated region
        $region33: #{tpu_custom_call.1} parent=11 // pred_check
          %p373 = pneg %p271
        $region34: #{tpu_custom_call.1} parent=11 // pred_check_branch
          %375 = sbr.rel (%p373) target = $region36
        $region35: #{tpu_custom_call.1} parent=11 // pred_region
          _
        $region36: #{tpu_custom_call.1} parent=11 // pred_fallthru
          _
      $region12: #{tpu_custom_call.1} parent=5 // pred_fallthru
        _
      %p376 = scmp.lt.s32.totalorder %s27, 2
      // Predicated region
      $region37: #{tpu_custom_call.1} parent=5 // pred_check
        %p377 = pneg %p376
      $region38: #{tpu_custom_call.1} parent=5 // pred_check_branch
        %379 = sbr.rel (%p377) target = $region40
      $region39: #{tpu_custom_call.1} parent=5 // pred_region
        // Predicated region
        $region41: #{tpu_custom_call.1} parent=39 // pred_check
          %p380 = pneg %p61
        $region42: #{tpu_custom_call.1} parent=39 // pred_check_branch
          %382 = sbr.rel (%p380) target = $region44
        $region43: #{tpu_custom_call.1} parent=39 // pred_region
          %s383 = sand.u32 %s51, 1
          %s384 = scalar_lea.sflag [#allocation4], %s383
          %s385 = sand.u32 %s51, 1
          %s386 = smul.addr %s385, 8
          %s387 = scalar_lea.vmem [#allocation3], %s386
          %389 = vsyncadd %s384, 0
          %s390 = sadd.s32 %s35, %s34
          %s391 = smul.addr %s390, 8
          %s392 = scalar_lea.hbm %s0, %s391
          %s394 = sshll.u32 %s392, 4
          %s395 = int_to_ptr.hbm [resolvable:$true] %s394
          %s396 = sshll.u32 %s387, 4
          %s397 = int_to_ptr.vmem [resolvable:$true] %s396
          %399 = dma.hbm_to_vmem [thread:$0]  %s395, 128, %s397, %s384
        $region44: #{tpu_custom_call.1} parent=39 // pred_fallthru
          _
        // Predicated region
        $region45: #{tpu_custom_call.1} parent=39 // pred_check
          %p400 = pneg %p87
        $region46: #{tpu_custom_call.1} parent=39 // pred_check_branch
          %402 = sbr.rel (%p400) target = $region48
        $region47: #{tpu_custom_call.1} parent=39 // pred_region
          %s403 = sand.u32 %s27, 1
          %s404 = scalar_lea.sflag [#allocation7], %s403
          %s405 = sand.u32 %s77, 1
          %s406 = smul.addr %s405, 8
          %s407 = scalar_lea.vmem [#allocation6], %s406
          %409 = vsyncadd %s404, 0
          %s410 = smul.addr %s34, 8
          %s411 = scalar_lea.hbm %s1, %s410
          %s413 = sshll.u32 %s411, 4
          %s414 = int_to_ptr.hbm [resolvable:$true] %s413
          %s415 = sshll.u32 %s407, 4
          %s416 = int_to_ptr.vmem [resolvable:$true] %s415
          %418 = dma.hbm_to_vmem [thread:$0]  %s414, 128, %s416, %s404
        $region48: #{tpu_custom_call.1} parent=39 // pred_fallthru
          _
        // Predicated region
        $region49: #{tpu_custom_call.1} parent=39 // pred_check
          %p419 = pneg %p113
        $region50: #{tpu_custom_call.1} parent=39 // pred_check_branch
          %421 = sbr.rel (%p419) target = $region52
        $region51: #{tpu_custom_call.1} parent=39 // pred_region
          %s422 = sand.u32 %s27, 1
          %s423 = scalar_lea.sflag [#allocation7], %s422
          %s424 = sand.u32 %s103, 1
          %s425 = smul.addr %s424, 8
          %s426 = scalar_lea.vmem [#allocation8], %s425
          %428 = vsyncadd %s423, 0
          %s429 = smul.addr %s34, 8
          %s430 = scalar_lea.hbm %s2, %s429
          %s432 = sshll.u32 %s430, 4
          %s433 = int_to_ptr.hbm [resolvable:$true] %s432
          %s434 = sshll.u32 %s426, 4
          %s435 = int_to_ptr.vmem [resolvable:$true] %s434
          %437 = dma.hbm_to_vmem [thread:$0]  %s433, 128, %s435, %s423
        $region52: #{tpu_custom_call.1} parent=39 // pred_fallthru
          _
        // Predicated region
        $region53: #{tpu_custom_call.1} parent=39 // pred_check
          %p438 = pneg %p139
        $region54: #{tpu_custom_call.1} parent=39 // pred_check_branch
          %440 = sbr.rel (%p438) target = $region56
        $region55: #{tpu_custom_call.1} parent=39 // pred_region
          %p441 = scmp.lt.s32.totalorder %s34, 1
          %s442 = scalar_select %p441, %s34, 1
          %s443 = scalar_lea.vmem %s3, %s442
        $region56: #{tpu_custom_call.1} parent=39 // pred_fallthru
          _
      $region40: #{tpu_custom_call.1} parent=5 // pred_fallthru
        _
      %p444 = scmp.le.s32.totalorder 1, %s27
      %p445 = scmp.lt.s32.totalorder %s27, 3
      %p446 = pnand %p444, %p445
      %p447 = pneg %p446
      // Predicated region
      $region57: #{tpu_custom_call.1} parent=5 // pred_check
        _
      $region58: #{tpu_custom_call.1} parent=5 // pred_check_branch
        %449 = sbr.rel (%p446) target = $region60
      $region59: #{tpu_custom_call.1} parent=5 // pred_region
        %s450 = ssub.s32 %s27, 1
        %s451 = sand.u32 %s54, 1
        %s452 = scalar_lea.sflag [#allocation4], %s451
        %s453 = sand.u32 %s54, 1
        %s454 = smul.addr %s453, 8
        %s455 = scalar_lea.vmem [#allocation3], %s454
        // Predicated region
        $region61: #{tpu_custom_call.1} parent=59 // pred_check
          %p456 = pneg %p67
        $region62: #{tpu_custom_call.1} parent=59 // pred_check_branch
          %458 = sbr.rel (%p456) target = $region64
        $region63: #{tpu_custom_call.1} parent=59 // pred_region
          %460 = dma.done %s452, 128
        $region64: #{tpu_custom_call.1} parent=59 // pred_fallthru
          _
        %s461 = sand.u32 %s32, 1
        %s462 = scalar_lea.sflag [#allocation7], %s461
        %s463 = sand.u32 %s80, 1
        %s464 = smul.addr %s463, 8
        %s465 = scalar_lea.vmem [#allocation6], %s464
        // Predicated region
        $region65: #{tpu_custom_call.1} parent=59 // pred_check
          %p466 = pneg %p93
        $region66: #{tpu_custom_call.1} parent=59 // pred_check_branch
          %468 = sbr.rel (%p466) target = $region68
        $region67: #{tpu_custom_call.1} parent=59 // pred_region
          %470 = dma.done %s462, 128
        $region68: #{tpu_custom_call.1} parent=59 // pred_fallthru
          _
        %s471 = sand.u32 %s32, 1
        %s472 = scalar_lea.sflag [#allocation7], %s471
        %s473 = sand.u32 %s106, 1
        %s474 = smul.addr %s473, 8
        %s475 = scalar_lea.vmem [#allocation8], %s474
        // Predicated region
        $region69: #{tpu_custom_call.1} parent=59 // pred_check
          %p476 = pneg %p119
        $region70: #{tpu_custom_call.1} parent=59 // pred_check_branch
          %478 = sbr.rel (%p476) target = $region72
        $region71: #{tpu_custom_call.1} parent=59 // pred_region
          %480 = dma.done %s472, 128
        $region72: #{tpu_custom_call.1} parent=59 // pred_fallthru
          _
        // Predicated region
        $region73: #{tpu_custom_call.1} parent=59 // pred_check
          %p481 = pneg %p166
        $region74: #{tpu_custom_call.1} parent=59 // pred_check_branch
          %483 = sbr.rel (%p481) target = $region76
        $region75: #{tpu_custom_call.1} parent=59 // pred_region
          %485 = dma.done [#allocation10], 256
        $region76: #{tpu_custom_call.1} parent=59 // pred_fallthru
          _
        // Predicated region
        $region77: #{tpu_custom_call.1} parent=59 // pred_check
          %p486 = pneg %p187
        $region78: #{tpu_custom_call.1} parent=59 // pred_check_branch
          %488 = sbr.rel (%p486) target = $region80
        $region79: #{tpu_custom_call.1} parent=59 // pred_region
          %490 = dma.done [#allocation10], 256
        $region80: #{tpu_custom_call.1} parent=59 // pred_fallthru
          _
        // Predicated region
        $region81: #{tpu_custom_call.1} parent=59 // pred_check
          %p491 = pneg %p208
        $region82: #{tpu_custom_call.1} parent=59 // pred_check_branch
          %493 = sbr.rel (%p491) target = $region84
        $region83: #{tpu_custom_call.1} parent=59 // pred_region
          %495 = dma.done [#allocation13], 256
        $region84: #{tpu_custom_call.1} parent=59 // pred_fallthru
          _
        // Predicated region
        $region85: #{tpu_custom_call.1} parent=59 // pred_check
          %p496 = pneg %p229
        $region86: #{tpu_custom_call.1} parent=59 // pred_check_branch
          %498 = sbr.rel (%p496) target = $region88
        $region87: #{tpu_custom_call.1} parent=59 // pred_region
          %500 = dma.done [#allocation13], 256
        $region88: #{tpu_custom_call.1} parent=59 // pred_fallthru
          _
        %s501 = sand.u32 %s54, 1
        %s502 = scalar_lea.sflag [#allocation4], %s501
        %s503 = sand.u32 %s54, 1
        %s504 = smul.addr %s503, 8
        %s505 = scalar_lea.vmem [#allocation3], %s504
        %p506 = pneg %p67
        %p507 = pneg %p64
        %s508 = sand.u32 %s32, 1
        %s509 = scalar_lea.sflag [#allocation7], %s508
        %s510 = sand.u32 %s80, 1
        %s511 = smul.addr %s510, 8
        %s512 = scalar_lea.vmem [#allocation6], %s511
        %p513 = pneg %p93
        %p514 = pneg %p90
        %s515 = sand.u32 %s32, 1
        %s516 = scalar_lea.sflag [#allocation7], %s515
        %s517 = sand.u32 %s106, 1
        %s518 = smul.addr %s517, 8
        %s519 = scalar_lea.vmem [#allocation8], %s518
        %p520 = pneg %p119
        %p521 = pneg %p116
        %p522 = scmp.lt.s32.totalorder %s36, 1
        %s523 = scalar_select %p522, %s36, 1
        %s524 = scalar_lea.vmem %s3, %s523
        %p525 = pneg %p145
        %p526 = pneg %p142
        %p527 = pneg %p166
        %p528 = pneg %p163
        %p529 = pneg %p187
        %p530 = pneg %p184
        %p531 = pneg %p208
        %p532 = pneg %p205
        %p533 = pneg %p229
        %p534 = pneg %p226
        %p535 = pneg %p250
        %p536 = pneg %p247
        %p537 = pneg %p271
        %p538 = pneg %p268
        %p539 = pneg %p299
        %p540 = pneg %p296
        %s541 = sand.u32 %s286, 1
        %s542 = scalar_lea.sflag [#allocation5], %s541
        %s543 = sand.u32 %s286, 1
        %s544 = smul.addr %s543, 8
        %s545 = scalar_lea.vmem [#allocation15], %s544
        %p546 = scmp.lt.s32.totalorder %s36, 1
        %s547 = scalar_select %p546, %s36, 1
        %s548 = scalar_lea.vmem %s3, %s547
        %v550 = vld [vmem:[%s455] sm:$0xff]
        %v551 = vld [vmem:[%s465] sm:$0xff]
        %v552 = vld [vmem:[%s475] sm:$0xff]
        %v553 = vld [vmem:[%s548] sm:$0x1]
        %v554 = vunpack.c.0.s8 %v553
        %v555 = vcvt.s32.f32 %v554
        %v556 = vmul.f32 %v555, -1e+09
        %v557 = vperm.slane %v556, 0
        %v558 = vpack.c.bf16 %v550, %v550
        %v559 = vld [vmem:[#allocation9] sm:$0xf]
        %v560 = vld [vmem:[#allocation9 + $0x4] sm:$0xf]
        %v561 = vld [vmem:[#allocation9 + $0x8] sm:$0xf]
        %v562 = vld [vmem:[#allocation9 + $0xc] sm:$0xf]
        %v567 = vunpack.c.l.b16 %v559
        %v568 = vunpack.c.l.b16 %v560
        %v569 = vunpack.c.l.b16 %v561
        %v570 = vunpack.c.l.b16 %v562
        %v571 = vpack.c.b16 %v568, %v567
        %v572 = vpack.c.b16 %v570, %v569
        %vm575 = vcmask 261120
        %v577 = vsel %vm575, %v558, 0
        %579 = vmatpush.bf16.msra.mxu0 0
        %580 = vmatpush.bf16.msra.mxu0 0
        %581 = vmatpush.bf16.msra.mxu0 0
        %582 = vmatpush.bf16.msra.mxu0 0
        %583 = vmatpush.bf16.msra.mxu0 0
        %584 = vmatpush.bf16.msra.mxu0 0
        %585 = vmatpush.bf16.msra.mxu0 %v572
        %586 = vmatpush.bf16.msra.mxu0 %v571
        %587 = vmatmul.bf16.gmra.mxu0 %v577
        %v588 = vpop.f32.mrf.mxu0
        %v589 = vadd.f32 0.0, %v588
        %v590 = vpop.f32.mrf.mxu0
        %591 = vdwg.mxu0
        %v592 = vpack.c.bf16 %v551, %v551
        %v593 = vld [vmem:[#allocation11] sm:$0xf]
        %v594 = vld [vmem:[#allocation11 + $0x4] sm:$0xf]
        %v595 = vld [vmem:[#allocation11 + $0x8] sm:$0xf]
        %v596 = vld [vmem:[#allocation11 + $0xc] sm:$0xf]
        %v601 = vunpack.c.l.b16 %v593
        %v602 = vunpack.c.l.b16 %v594
        %v603 = vunpack.c.l.b16 %v595
        %v604 = vunpack.c.l.b16 %v596
        %v605 = vpack.c.b16 %v602, %v601
        %v606 = vpack.c.b16 %v604, %v603
        %v610 = vsel %vm575, %v592, 0
        %612 = vmatpush.bf16.msra.mxu0 0
        %613 = vmatpush.bf16.msra.mxu0 0
        %614 = vmatpush.bf16.msra.mxu0 0
        %615 = vmatpush.bf16.msra.mxu0 0
        %616 = vmatpush.bf16.msra.mxu0 0
        %617 = vmatpush.bf16.msra.mxu0 0
        %618 = vmatpush.bf16.msra.mxu0 %v606
        %619 = vmatpush.bf16.msra.mxu0 %v605
        %620 = vmatmul.bf16.gmra.mxu0 %v610
        %v621 = vpop.f32.mrf.mxu0
        %v622 = vadd.f32 0.0, %v621
        %v623 = vpop.f32.mrf.mxu0
        %624 = vdwg.mxu0
        %v625 = vpack.c.bf16 %v552, %v552
        %v626 = vld [vmem:[#allocation12] sm:$0xf]
        %v627 = vld [vmem:[#allocation12 + $0x4] sm:$0xf]
        %v628 = vld [vmem:[#allocation12 + $0x8] sm:$0xf]
        %v629 = vld [vmem:[#allocation12 + $0xc] sm:$0xf]
        %v634 = vunpack.c.l.b16 %v626
        %v635 = vunpack.c.l.b16 %v627
        %v636 = vunpack.c.l.b16 %v628
        %v637 = vunpack.c.l.b16 %v629
        %v638 = vpack.c.b16 %v635, %v634
        %v639 = vpack.c.b16 %v637, %v636
        %v643 = vsel %vm575, %v625, 0
        %645 = vmatpush.bf16.msra.mxu0 0
        %646 = vmatpush.bf16.msra.mxu0 0
        %647 = vmatpush.bf16.msra.mxu0 0
        %648 = vmatpush.bf16.msra.mxu0 0
        %649 = vmatpush.bf16.msra.mxu0 0
        %650 = vmatpush.bf16.msra.mxu0 0
        %651 = vmatpush.bf16.msra.mxu0 %v639
        %652 = vmatpush.bf16.msra.mxu0 %v638
        %653 = vmatmul.bf16.gmra.mxu0 %v643
        %v654 = vpop.f32.mrf.mxu0
        %v655 = vadd.f32 0.0, %v654
        %v656 = vpop.f32.mrf.mxu0
        %657 = vdwg.mxu0
        %v658 = vpack.c.bf16 %v589, %v589
        %v659 = vpack.c.bf16 %v622, %v622
        %v660 = vpack.c.bf16 %v655, %v655
        %vm661 = vcmask 64512
        %v663 = vsel %vm661, %v658, 0
        %v666 = vsel %vm661, %v659, 0
        %668 = vmatpush.bf16.xpose.msra.mxu0 0
        %669 = vmatpush.bf16.xpose.msra.mxu0 0
        %670 = vmatpush.bf16.xpose.msra.mxu0 0
        %671 = vmatpush.bf16.xpose.msra.mxu0 0
        %672 = vmatpush.bf16.xpose.msra.mxu0 0
        %673 = vmatpush.bf16.xpose.msra.mxu0 0
        %674 = vmatpush.bf16.xpose.msra.mxu0 0
        %675 = vmatpush.bf16.xpose.msra.mxu0 %v666
        %676 = vmatmul.bf16.gmra.mxu0 %v663
        %v677 = vpop.f32.mrf.mxu0
        %v678 = vadd.f32 %v557, %v677
        %v679 = vpop.f32.mrf.mxu0
        %680 = vdwg.mxu0
        %v681 = vsel %vm661, %v678, -inf
        %682 = vmax.xlane.f32.xlu0 %v681
        %v683 = vpop.xlane.xlu0 %682
        %v684 = vsub.f32 %v678, %v683
        %v685 = vmul.f32 %v684, 1.442695
        %v686 = vpow.pop %v685
        %v687 = vsel %vm661, %v686, 0.0
        %688 = vadd.xlane.f32.xlu0 %v687
        %v689 = vpop.xlane.xlu0 %688
        %v690 = vrcp.pop %v689
        %v691 = vmul.f32 %v686, %v690
        %v692 = vpack.c.bf16 %v691, %v691
        %v694 = vsel %vm661, %v692, 0
        %vm696 = vcmask 1043456
        %v698 = vsel %vm696, %v660, 0
        %700 = vmatpush.bf16.msra.mxu0 0
        %701 = vmatpush.bf16.msra.mxu0 0
        %702 = vmatpush.bf16.msra.mxu0 0
        %703 = vmatpush.bf16.msra.mxu0 0
        %704 = vmatpush.bf16.msra.mxu0 0
        %705 = vmatpush.bf16.msra.mxu0 0
        %706 = vmatpush.bf16.msra.mxu0 0
        %707 = vmatpush.bf16.msra.mxu0 %v698
        %708 = vmatmul.bf16.gmra.mxu0 %v694
        %v709 = vpop.f32.mrf.mxu0
        %v710 = vadd.f32 0.0, %v709
        %v711 = vpop.f32.mrf.mxu0
        %712 = vdwg.mxu0
        %713 = vst.msk [vmem:[#allocation2] sm:$0xff] %vm661, %v710
        %v715 = vunpack.c.l.b16 %v658
        %v716 = vpack.c.b16 %v715, %v715
        %717 = vrot.lane.b32.xlu0 %v716, 120
        %v718 = vpop.permute.xlu0 %717
        %v720 = vunpack.c.l.b16 %v659
        %v721 = vpack.c.b16 %v720, %v720
        %722 = vrot.lane.b32.xlu0 %v721, 120
        %v723 = vpop.permute.xlu0 %722
        %v725 = vsel %vm661, %v718, 0
        %v728 = vsel %vm661, %v723, 0
        %730 = vmatpush.bf16.xpose.msra.mxu0 0
        %731 = vmatpush.bf16.xpose.msra.mxu0 0
        %732 = vmatpush.bf16.xpose.msra.mxu0 0
        %733 = vmatpush.bf16.xpose.msra.mxu0 0
        %734 = vmatpush.bf16.xpose.msra.mxu0 0
        %735 = vmatpush.bf16.xpose.msra.mxu0 0
        %736 = vmatpush.bf16.xpose.msra.mxu0 0
        %737 = vmatpush.bf16.xpose.msra.mxu0 %v728
        %738 = vmatmul.bf16.gmra.mxu0 %v725
        %v739 = vpop.f32.mrf.mxu0
        %v740 = vadd.f32 %v557, %v739
        %v741 = vpop.f32.mrf.mxu0
        %742 = vdwg.mxu0
        %v743 = vsel %vm661, %v740, -inf
        %744 = vmax.xlane.f32.xlu0 %v743
        %v745 = vpop.xlane.xlu0 %744
        %v746 = vsub.f32 %v740, %v745
        %v747 = vmul.f32 %v746, 1.442695
        %v748 = vpow.pop %v747
        %v749 = vsel %vm661, %v748, 0.0
        %750 = vadd.xlane.f32.xlu0 %v749
        %v751 = vpop.xlane.xlu0 %750
        %v752 = vrcp.pop %v751
        %v753 = vmul.f32 %v748, %v752
        %v754 = vpack.c.bf16 %v753, %v753
        %v756 = vunpack.c.l.b16 %v660
        %v757 = vpack.c.b16 %v756, %v756
        %758 = vrot.lane.b32.xlu0 %v757, 120
        %v759 = vpop.permute.xlu0 %758
        %v761 = vsel %vm661, %v754, 0
        %v764 = vsel %vm696, %v759, 0
        %766 = vmatpush.bf16.msra.mxu0 0
        %767 = vmatpush.bf16.msra.mxu0 0
        %768 = vmatpush.bf16.msra.mxu0 0
        %769 = vmatpush.bf16.msra.mxu0 0
        %770 = vmatpush.bf16.msra.mxu0 0
        %771 = vmatpush.bf16.msra.mxu0 0
        %772 = vmatpush.bf16.msra.mxu0 0
        %773 = vmatpush.bf16.msra.mxu0 %v764
        %774 = vmatmul.bf16.gmra.mxu0 %v761
        %v775 = vpop.f32.mrf.mxu0
        %v776 = vadd.f32 0.0, %v775
        %v777 = vpop.f32.mrf.mxu0
        %778 = vdwg.mxu0
        %780 = vrot.lane.b32.xlu0 %v776, 8
        %v781 = vpop.permute.xlu0 %780
        %vm783 = vcmask 130112
        %784 = vst.msk [vmem:[#allocation2] sm:$0xff] %vm783, %v781
        %785 = vrot.lane.b32.xlu0 %v716, 112
        %v786 = vpop.permute.xlu0 %785
        %787 = vrot.lane.b32.xlu0 %v721, 112
        %v788 = vpop.permute.xlu0 %787
        %v790 = vsel %vm661, %v786, 0
        %v793 = vsel %vm661, %v788, 0
        %795 = vmatpush.bf16.xpose.msra.mxu0 0
        %796 = vmatpush.bf16.xpose.msra.mxu0 0
        %797 = vmatpush.bf16.xpose.msra.mxu0 0
        %798 = vmatpush.bf16.xpose.msra.mxu0 0
        %799 = vmatpush.bf16.xpose.msra.mxu0 0
        %800 = vmatpush.bf16.xpose.msra.mxu0 0
        %801 = vmatpush.bf16.xpose.msra.mxu0 0
        %802 = vmatpush.bf16.xpose.msra.mxu0 %v793
        %803 = vmatmul.bf16.gmra.mxu0 %v790
        %v804 = vpop.f32.mrf.mxu0
        %v805 = vadd.f32 %v557, %v804
        %v806 = vpop.f32.mrf.mxu0
        %807 = vdwg.mxu0
        %v808 = vsel %vm661, %v805, -inf
        %809 = vmax.xlane.f32.xlu0 %v808
        %v810 = vpop.xlane.xlu0 %809
        %v811 = vsub.f32 %v805, %v810
        %v812 = vmul.f32 %v811, 1.442695
        %v813 = vpow.pop %v812
        %v814 = vsel %vm661, %v813, 0.0
        %815 = vadd.xlane.f32.xlu0 %v814
        %v816 = vpop.xlane.xlu0 %815
        %v817 = vrcp.pop %v816
        %v818 = vmul.f32 %v813, %v817
        %v819 = vpack.c.bf16 %v818, %v818
        %820 = vrot.lane.b32.xlu0 %v757, 112
        %v821 = vpop.permute.xlu0 %820
        %v823 = vsel %vm661, %v819, 0
        %v826 = vsel %vm696, %v821, 0
        %828 = vmatpush.bf16.msra.mxu0 0
        %829 = vmatpush.bf16.msra.mxu0 0
        %830 = vmatpush.bf16.msra.mxu0 0
        %831 = vmatpush.bf16.msra.mxu0 0
        %832 = vmatpush.bf16.msra.mxu0 0
        %833 = vmatpush.bf16.msra.mxu0 0
        %834 = vmatpush.bf16.msra.mxu0 0
        %835 = vmatpush.bf16.msra.mxu0 %v826
        %836 = vmatmul.bf16.gmra.mxu0 %v823
        %v837 = vpop.f32.mrf.mxu0
        %v838 = vadd.f32 0.0, %v837
        %v839 = vpop.f32.mrf.mxu0
        %840 = vdwg.mxu0
        %842 = vrot.lane.b32.xlu0 %v838, 16
        %v843 = vpop.permute.xlu0 %842
        %vm845 = vcmask 195712
        %846 = vst.msk [vmem:[#allocation2] sm:$0xff] %vm845, %v843
        %847 = vrot.lane.b32.xlu0 %v716, 104
        %v848 = vpop.permute.xlu0 %847
        %849 = vrot.lane.b32.xlu0 %v721, 104
        %v850 = vpop.permute.xlu0 %849
        %v852 = vsel %vm661, %v848, 0
        %v855 = vsel %vm661, %v850, 0
        %857 = vmatpush.bf16.xpose.msra.mxu0 0
        %858 = vmatpush.bf16.xpose.msra.mxu0 0
        %859 = vmatpush.bf16.xpose.msra.mxu0 0
        %860 = vmatpush.bf16.xpose.msra.mxu0 0
        %861 = vmatpush.bf16.xpose.msra.mxu0 0
        %862 = vmatpush.bf16.xpose.msra.mxu0 0
        %863 = vmatpush.bf16.xpose.msra.mxu0 0
        %864 = vmatpush.bf16.xpose.msra.mxu0 %v855
        %865 = vmatmul.bf16.gmra.mxu0 %v852
        %v866 = vpop.f32.mrf.mxu0
        %v867 = vadd.f32 %v557, %v866
        %v868 = vpop.f32.mrf.mxu0
        %869 = vdwg.mxu0
        %v870 = vsel %vm661, %v867, -inf
        %871 = vmax.xlane.f32.xlu0 %v870
        %v872 = vpop.xlane.xlu0 %871
        %v873 = vsub.f32 %v867, %v872
        %v874 = vmul.f32 %v873, 1.442695
        %v875 = vpow.pop %v874
        %v876 = vsel %vm661, %v875, 0.0
        %877 = vadd.xlane.f32.xlu0 %v876
        %v878 = vpop.xlane.xlu0 %877
        %v879 = vrcp.pop %v878
        %v880 = vmul.f32 %v875, %v879
        %v881 = vpack.c.bf16 %v880, %v880
        %882 = vrot.lane.b32.xlu0 %v757, 104
        %v883 = vpop.permute.xlu0 %882
        %v885 = vsel %vm661, %v881, 0
        %v888 = vsel %vm696, %v883, 0
        %890 = vmatpush.bf16.msra.mxu0 0
        %891 = vmatpush.bf16.msra.mxu0 0
        %892 = vmatpush.bf16.msra.mxu0 0
        %893 = vmatpush.bf16.msra.mxu0 0
        %894 = vmatpush.bf16.msra.mxu0 0
        %895 = vmatpush.bf16.msra.mxu0 0
        %896 = vmatpush.bf16.msra.mxu0 0
        %897 = vmatpush.bf16.msra.mxu0 %v888
        %898 = vmatmul.bf16.gmra.mxu0 %v885
        %v899 = vpop.f32.mrf.mxu0
        %v900 = vadd.f32 0.0, %v899
        %v901 = vpop.f32.mrf.mxu0
        %902 = vdwg.mxu0
        %904 = vrot.lane.b32.xlu0 %v900, 24
        %v905 = vpop.permute.xlu0 %904
        %vm907 = vcmask 261312
        %908 = vst.msk [vmem:[#allocation2] sm:$0xff] %vm907, %v905
        %v909 = vld [vmem:[#allocation2] sm:$0xff]
        %v910 = vpack.c.bf16 %v909, %v909
        %v911 = vld [vmem:[#allocation14] sm:$0xf]
        %v912 = vld [vmem:[#allocation14 + $0x4] sm:$0xf]
        %v913 = vld [vmem:[#allocation14 + $0x8] sm:$0xf]
        %v914 = vld [vmem:[#allocation14 + $0xc] sm:$0xf]
        %v919 = vunpack.c.l.b16 %v911
        %v920 = vunpack.c.l.b16 %v912
        %v921 = vunpack.c.l.b16 %v913
        %v922 = vunpack.c.l.b16 %v914
        %v923 = vpack.c.b16 %v920, %v919
        %v924 = vpack.c.b16 %v922, %v921
        %v928 = vsel %vm575, %v910, 0
        %930 = vmatpush.bf16.msra.mxu0 0
        %931 = vmatpush.bf16.msra.mxu0 0
        %932 = vmatpush.bf16.msra.mxu0 0
        %933 = vmatpush.bf16.msra.mxu0 0
        %934 = vmatpush.bf16.msra.mxu0 0
        %935 = vmatpush.bf16.msra.mxu0 0
        %936 = vmatpush.bf16.msra.mxu0 %v924
        %937 = vmatpush.bf16.msra.mxu0 %v923
        %938 = vmatmul.bf16.gmra.mxu0 %v928
        %v939 = vpop.f32.mrf.mxu0
        %v940 = vadd.f32 %v550, %v939
        %v941 = vpop.f32.mrf.mxu0
        %942 = vdwg.mxu0
        %v943 = vsel %vm575, %v940, 0.0
        %944 = vadd.xlane.f32.xlu0 %v943
        %v945 = vpop.xlane.xlu0 %944
        %v946 = vrcp.pop 32.0
        %v947 = vmul.f32 32.0, %v946
        %v948 = vsub.f32 1.0, %v947
        %v949 = vmul.f32 %v946, %v948
        %v950 = vadd.f32 %v946, %v949
        %vm951 = vweird.f32 %v946
        %v952 = vsel %vm951, %v946, %v950
        %v953 = vmul.f32 %v945, %v952
        %v954 = vsub.f32 %v940, %v953
        %v955 = vmul.f32 %v954, %v954
        %v956 = vsel %vm575, %v955, 0.0
        %957 = vadd.xlane.f32.xlu0 %v956
        %v958 = vpop.xlane.xlu0 %957
        %v959 = vmul.f32 %v958, %v952
        %v960 = vadd.f32 %v959, 1e-05
        %v961 = vrsqrt.pop %v960
        %v962 = vmul.f32 %v961, %v960
        %v963 = vmul.f32 %v962, %v961
        %v964 = vmul.f32 0.5, %v963
        %v965 = vsub.f32 1.5, %v964
        %v966 = vmul.f32 %v961, %v965
        %vm967 = vweird.f32 %v960
        %vm968 = vweird.f32 %v961
        %vm969 = vmor %vm967, %vm968
        %v970 = vsel %vm969, %v961, %v966
        %v971 = vmul.f32 %v954, %v970
        %v972 = vld [vmem:[%s8] sm:$0x1]
        %v974 = vperm.slane %v972, 0
        %v976 = vmul.f32 %v971, %v974
        %v977 = vld [vmem:[%s9] sm:$0x1]
        %v979 = vperm.slane %v977, 0
        %v981 = vadd.f32 %v976, %v979
        %982 = vst.msk [vmem:[%s545] sm:$0xff] %vm575, %v981
        %s983 = sand.u32 %s286, 1
        %s984 = scalar_lea.sflag [#allocation5], %s983
        %s985 = sand.u32 %s286, 1
        %s986 = smul.addr %s985, 8
        %s987 = scalar_lea.vmem [#allocation15], %s986
        // Predicated region
        $region89: #{tpu_custom_call.1} parent=59 // pred_check
          %p988 = pneg %p296
        $region90: #{tpu_custom_call.1} parent=59 // pred_check_branch
          %990 = sbr.rel (%p988) target = $region92
        $region91: #{tpu_custom_call.1} parent=59 // pred_region
          %992 = vsyncadd %s984, 0
          %s993 = sadd.s32 %s37, %s36
          %s994 = smul.addr %s993, 8
          %s995 = scalar_lea.hbm %s10, %s994
          %s997 = sshll.u32 %s987, 4
          %s998 = int_to_ptr.vmem [resolvable:$true] %s997
          %s999 = sshll.u32 %s995, 4
          %s1000 = int_to_ptr.hbm [resolvable:$true] %s999
          %1002 = dma.vmem_to_hbm [thread:$0]  %s998, 128, %s1000, %s984
        $region92: #{tpu_custom_call.1} parent=59 // pred_fallthru
          _
      $region60: #{tpu_custom_call.1} parent=5 // pred_fallthru
        _
      %p1003 = scmp.le.s32.totalorder 2, %s27
      // Predicated region
      $region93: #{tpu_custom_call.1} parent=5 // pred_check
        %p1004 = pneg %p1003
      $region94: #{tpu_custom_call.1} parent=5 // pred_check_branch
        %1006 = sbr.rel (%p1004) target = $region96
      $region95: #{tpu_custom_call.1} parent=5 // pred_region
        %s1007 = ssub.s32 %s27, 2
        // Predicated region
        $region97: #{tpu_custom_call.1} parent=95 // pred_check
          %p1008 = pneg %p302
        $region98: #{tpu_custom_call.1} parent=95 // pred_check_branch
          %1010 = sbr.rel (%p1008) target = $region100
        $region99: #{tpu_custom_call.1} parent=95 // pred_region
          %s1011 = sand.u32 %s287, 1
          %s1012 = scalar_lea.sflag [#allocation5], %s1011
          %s1013 = sand.u32 %s287, 1
          %s1014 = smul.addr %s1013, 8
          %s1015 = scalar_lea.vmem [#allocation15], %s1014
          %1017 = dma.done %s1012, 128
        $region100: #{tpu_custom_call.1} parent=95 // pred_fallthru
          _
      $region96: #{tpu_custom_call.1} parent=5 // pred_fallthru
        _
    $region6: #{tpu_custom_call.1} parent=1 // loop_footer
      %s31 = sadd.s32 1, %s27
    $region7: #{tpu_custom_call.1} parent=1 // loop_footer_branch
      %26 = sbr.rel target = $region3
    $region8: #{tpu_custom_call.1} parent=1 // loop_exit
      _
    %1018 = vsyncpa [#allocation4], 1
    %s1019 = scalar_lea.sflag [#allocation4], 1
    %1020 = vsyncpa %s1019, 1
    %1021 = vsyncpa [#allocation7], 1
    %s1022 = scalar_lea.sflag [#allocation7], 1
    %1023 = vsyncpa %s1022, 1
    %1024 = vsyncpa [#allocation10], 1
    %1025 = vsyncpa [#allocation13], 1
    %1026 = vsyncpa [#allocation5], 1
    %s1027 = scalar_lea.sflag [#allocation5], 1
    %1028 = vsyncpa %s1027, 1

</llo_original>
